<compile_context>
chip_gen: v7x
topology: tpu7x:2x2x1
jax: 0.10.0
libtpu: 0.0.40
codegen_flags: <defaults>
</compile_context>

<pallas_src>
import jax
import jax.numpy as jnp
from jax import lax
from jax.experimental import pallas as pl
from jax.experimental.pallas import tpu as pltpu


def _round_up(x, m):
    return ((x + m - 1) // m) * m


def _vmem_capacity_bytes():
    try:
        return int(pltpu.get_tpu_info().vmem_capacity_bytes)
    except Exception:
        return 64 * 1024 * 1024  # conservative fallback (v7x per-core VMEM)


def _make_rnn_kernel(t_total, tb, unroll, mxu_dtype):
    """Kernel factory closing over static sizes / dtypes."""
    prec = lax.Precision.HIGHEST if mxu_dtype == jnp.float32 else None

    def kernel(x_ref, h0_ref, wih_ref, whh_ref, bias_ref,
               states_ref, hfin_ref, h_scr, u_scr):
        bb = x_ref.shape[0]
        dp = x_ref.shape[2]
        hp = whh_ref.shape[1]
        t_blk = pl.program_id(1)

        # Fresh batch block (time axis restarts): load the initial hidden state.
        @pl.when(t_blk == 0)
        def _():
            h_scr[...] = h0_ref[...].astype(jnp.float32)

        # Fused, non-recurrent input projection for the whole time block:
        # one (Bb*Tb, D) @ (D, H) MXU GEMM with f32 accumulation.
        x2d = x_ref[...].reshape(bb * tb, dp).astype(mxu_dtype)
        u2d = jnp.dot(x2d, wih_ref[...],
                      preferred_element_type=jnp.float32, precision=prec)
        u_scr[...] = u2d.reshape(bb, tb, hp) + bias_ref[...].astype(jnp.float32)

        whh = whh_ref[...]  # resident recurrent weight, hoisted out of the loop

        # TODO(synk): for tiny Bb, drive the MXU explicitly (pltpu.matmul_push_rhs once
        # per block + matmul_acc_lhs per step) so W_hh is not re-streamed every step.
        def step(i, h):
            pre = u_scr[:, i, :] + jnp.dot(
                h.astype(mxu_dtype), whh,
                preferred_element_type=jnp.float32, precision=prec)
            h_new = jnp.tanh(pre)
            states_ref[:, i, :] = h_new.astype(states_ref.dtype)

            # Capture the true final hidden at global step T-1 (time padding may follow).
            @pl.when(t_blk * tb + i == t_total - 1)
            def _():
                hfin_ref[...] = h_new

            return h_new

        h_scr[...] = lax.fori_loop(0, tb, step, h_scr[...],
                                   unroll=min(unroll, tb))

    return kernel


def rnn_forward(x, h0, w_ih, w_hh, b_ih, b_hh, *,
                time_block=64, batch_block=None,
                mxu_dtype=jnp.bfloat16, unroll=8):
    """x: (B, T, D), h0: (B, H) -> (states (B, T, H), hidden (B, H))."""
    B, T, D = x.shape
    H = h0.shape[-1]
    out_dtype = x.dtype

    Bp = _round_up(B, 8)
    Dp = _round_up(D, 128)
    Hp = _round_up(H, 128)

    tb = min(_round_up(max(time_block, 8), 8), _round_up(T, 8))
    bb = Bp if batch_block is None else min(_round_up(batch_block, 8), Bp)

    # ---- Size the time/batch blocks against this generation's VMEM capacity. ----
    vmem_cap = _vmem_capacity_bytes()
    budget = int(0.70 * vmem_cap)
    mxu_bytes = jnp.dtype(mxu_dtype).itemsize
    out_bytes = jnp.dtype(out_dtype).itemsize
    x_bytes = jnp.dtype(x.dtype).itemsize

    def footprint(tb_, bb_):
        pipelined = (bb_ * tb_ * Dp * x_bytes        # x block
                     + bb_ * tb_ * Hp * out_bytes    # states block
                     + Dp * Hp * mxu_bytes           # W_ih
                     + Hp * Hp * mxu_bytes           # W_hh
                     + bb_ * Hp * 4                  # h0
                     + Hp * 4                        # bias
                     + bb_ * Hp * 4)                 # final hidden
        scratch = bb_ * Hp * 4 + bb_ * tb_ * Hp * 4  # h_scr + u_scr
        return 2 * pipelined + scratch               # conservative: everything x2

    while tb > 8 and footprint(tb, bb) > budget:
        tb = max(8, (tb // 2 // 8) * 8)
    while bb > 8 and footprint(tb, bb) > budget:
        bb = max(8, _round_up(bb // 2, 8))

    Bp = _round_up(Bp, bb)
    Tp = _round_up(T, tb)

    # ---- Pad once to TPU-friendly shapes (zero padding is inert for this recurrence). ----
    x_p = jnp.pad(x, ((0, Bp - B), (0, Tp - T), (0, Dp - D)))
    h0_p = jnp.pad(h0.astype(jnp.float32), ((0, Bp - B), (0, Hp - H)))
    wih_p = jnp.pad(w_ih, ((0, Dp - D), (0, Hp - H))).astype(mxu_dtype)
    whh_p = jnp.pad(w_hh, ((0, Hp - H), (0, Hp - H))).astype(mxu_dtype)
    bias_p = jnp.pad((b_ih + b_hh).astype(jnp.float32), (0, Hp - H)).reshape(1, Hp)

    grid = (Bp // bb, Tp // tb)
    kernel = _make_rnn_kernel(T, tb, unroll, mxu_dtype)

    vmem_limit = int(min(max(2 * footprint(tb, bb), 32 * 1024 * 1024),
                         int(0.9 * vmem_cap)))

    states_p, hfin_p = pl.pallas_call(
        kernel,
        out_shape=(jax.ShapeDtypeStruct((Bp, Tp, Hp), out_dtype),
                   jax.ShapeDtypeStruct((Bp, Hp), jnp.float32)),
        grid_spec=pltpu.PrefetchScalarGridSpec(
            num_scalar_prefetch=0,
            grid=grid,
            in_specs=[
                pl.BlockSpec((bb, tb, Dp), lambda b, t: (b, t, 0)),  # x time block
                pl.BlockSpec((bb, Hp), lambda b, t: (b, 0)),         # h0 (resident)
                pl.BlockSpec((Dp, Hp), lambda b, t: (0, 0)),         # W_ih (resident)
                pl.BlockSpec((Hp, Hp), lambda b, t: (0, 0)),         # W_hh (resident)
                pl.BlockSpec((1, Hp), lambda b, t: (0, 0)),          # bias (resident)
            ],
            out_specs=[
                pl.BlockSpec((bb, tb, Hp), lambda b, t: (b, t, 0)),  # states, batch-major
                pl.BlockSpec((bb, Hp), lambda b, t: (b, 0)),         # final hidden (f32)
            ],
            scratch_shapes=[
                pltpu.VMEM((bb, Hp), jnp.float32),       # carried hidden state
                pltpu.VMEM((bb, tb, Hp), jnp.float32),   # per-block input projection
            ],
        ),
        compiler_params=pltpu.CompilerParams(
            dimension_semantics=("parallel", "arbitrary"),  # batch parallel, time serial
            vmem_limit_bytes=vmem_limit,
        ),
    )(x_p, h0_p, wih_p, whh_p, bias_p)

    states = states_p[:B, :T, :H]            # already (B, T, H): no wrapper transpose pass
    h_fin = hfin_p[:B, :H].astype(h0.dtype)
    return states, h_fin


def rnn_reference(x, h0, w_ih, w_hh, b_ih, b_hh):
    """Plain-JAX reference mirroring the PyTorch loop (exact f32 matmuls)."""
    prec = lax.Precision.HIGHEST

    def step(h, x_t):
        h_new = jnp.tanh(jnp.dot(x_t, w_ih, precision=prec) + b_ih
                         + jnp.dot(h, w_hh, precision=prec) + b_hh)
        return h_new, h_new

    h_fin, states_tm = lax.scan(step, h0, jnp.transpose(x, (1, 0, 2)))
    return jnp.transpose(states_tm, (1, 0, 2)), h_fin


if __name__ == "__main__":
    B, T, D, H = 2, 8, 16, 32

    key = jax.random.PRNGKey(0)
    k1, k2, k3, k4, k5, k6 = jax.random.split(key, 6)

    x = jax.random.normal(k1, (B, T, D), dtype=jnp.float32)
    h0 = jax.random.normal(k2, (B, H), dtype=jnp.float32)

    # RNNCell parameter shapes: W_ih (D, H), W_hh (H, H), biases (H,)
    scale = 1.0 / jnp.sqrt(jnp.float32(H))
    w_ih = jax.random.uniform(k3, (D, H), jnp.float32, -scale, scale)
    w_hh = jax.random.uniform(k4, (H, H), jnp.float32, -scale, scale)
    b_ih = jax.random.uniform(k5, (H,), jnp.float32, -scale, scale)
    b_hh = jax.random.uniform(k6, (H,), jnp.float32, -scale, scale)

    states_ref, h_ref = rnn_reference(x, h0, w_ih, w_hh, b_ih, b_hh)

    # Fast path: bf16 MXU operands, f32 accumulation / f32 carried hidden (default).
    fwd_fast = jax.jit(lambda *a: rnn_forward(*a))
    states, h_fin = fwd_fast(x, h0, w_ih, w_hh, b_ih, b_hh)
    jax.block_until_ready((states, h_fin))
    assert states.shape == (B, T, H) and h_fin.shape == (B, H)
    assert jnp.max(jnp.abs(states - states_ref)) < 1e-1
    assert jnp.max(jnp.abs(h_fin - h_ref)) < 1e-1

    # Exact path: f32 MXU operands; tight agreement with the f32 reference.
    fwd_exact = jax.jit(lambda *a: rnn_forward(*a, mxu_dtype=jnp.float32))
    states32, h_fin32 = fwd_exact(x, h0, w_ih, w_hh, b_ih, b_hh)
    jax.block_until_ready((states32, h_fin32))
    assert jnp.allclose(states32, states_ref, atol=1e-4, rtol=1e-4)
    assert jnp.allclose(h_fin32, h_ref, atol=1e-4, rtol=1e-4)

    print("KERNEL_OK")
</pallas_src>

<mosaic_0001>
module attributes {stable_mosaic.version = 11 : i64} {
  func.func @kernel(%arg0: i32, %arg1: i32, %arg2: memref<8x8x128xf32, #tpu.memory_space<vmem>>, %arg3: memref<8x128xf32, #tpu.memory_space<vmem>>, %arg4: memref<128x128xbf16, #tpu.memory_space<vmem>>, %arg5: memref<128x128xbf16, #tpu.memory_space<vmem>>, %arg6: memref<1x128xf32, #tpu.memory_space<vmem>>, %arg7: memref<8x8x128xf32, #tpu.memory_space<vmem>>, %arg8: memref<8x128xf32, #tpu.memory_space<vmem>>, %arg9: memref<8x128xf32, #tpu.memory_space<vmem>>, %arg10: memref<8x8x128xf32, #tpu.memory_space<vmem>>) attributes {dimension_semantics = [#tpu.dimension_semantics<parallel>, #tpu.dimension_semantics<arbitrary>], iteration_bounds = array<i64: 1, 1>, scalar_prefetch = 0 : i64, scratch_operands = 2 : i64, tpu.core_type = #tpu.core_type<tc>, window_params = [{transform_indices = @transform_0, window_bounds = array<i64: 8, 8, 128>}, {transform_indices = @transform_1, window_bounds = array<i64: 8, 128>}, {pipeline_mode = #tpu.pipeline_mode<synchronous>, transform_indices = @transform_2, window_bounds = array<i64: 128, 128>}, {pipeline_mode = #tpu.pipeline_mode<synchronous>, transform_indices = @transform_3, window_bounds = array<i64: 128, 128>}, {pipeline_mode = #tpu.pipeline_mode<synchronous>, transform_indices = @transform_4, window_bounds = array<i64: 1, 128>}, {transform_indices = @transform_5, window_bounds = array<i64: 8, 8, 128>}, {transform_indices = @transform_6, window_bounds = array<i64: 8, 128>}]} {
    %c0_i32 = arith.constant 0 : i32
    %0 = arith.cmpi eq, %arg1, %c0_i32 : i32
    %1 = arith.extui %0 : i1 to i32
    %c0_i32_0 = arith.constant 0 : i32
    %2 = arith.cmpi ne, %1, %c0_i32_0 : i32
    scf.if %2 {
      %c0_81 = arith.constant 0 : index
      %c0_82 = arith.constant 0 : index
      %145 = vector.load %arg3[%c0_81, %c0_82] : memref<8x128xf32, #tpu.memory_space<vmem>>, vector<8x128xf32>
      %c0_83 = arith.constant 0 : index
      %c0_84 = arith.constant 0 : index
      %146 = vector.load %arg9[%c0_83, %c0_84] : memref<8x128xf32, #tpu.memory_space<vmem>>, vector<8x128xf32>
      tpu.vector_store %arg9[%c0_83, %c0_84], %145 {strides = array<i32>} : memref<8x128xf32, #tpu.memory_space<vmem>>, vector<8x128xf32>,
    } else {
    }
    %c0 = arith.constant 0 : index
    %c0_1 = arith.constant 0 : index
    %c0_2 = arith.constant 0 : index
    %3 = vector.load %arg2[%c0, %c0_1, %c0_2] : memref<8x8x128xf32, #tpu.memory_space<vmem>>, vector<8x8x128xf32>
    %4 = vector.shape_cast %3 : vector<8x8x128xf32> to vector<64x128xf32>
    %5 = arith.truncf %4 : vector<64x128xf32> to vector<64x128xbf16>
    %c0_3 = arith.constant 0 : index
    %c0_4 = arith.constant 0 : index
    %6 = vector.load %arg4[%c0_3, %c0_4] : memref<128x128xbf16, #tpu.memory_space<vmem>>, vector<128x128xbf16>
    %cst = arith.constant dense<0.000000e+00> : vector<64x128xf32>
    %7 = tpu.matmul %5, %6, %cst {dimension_numbers = #tpu.dot_dimension_numbers<[1], [0], [0], [1], [0, 0, 1, 1], [], []>} : vector<64x128xbf16>, vector<128x128xbf16>, vector<64x128xf32> -> vector<64x128xf32>
    %8 = vector.shape_cast %7 : vector<64x128xf32> to vector<8x8x128xf32>
    %c0_5 = arith.constant 0 : index
    %c0_6 = arith.constant 0 : index
    %9 = vector.load %arg6[%c0_5, %c0_6] : memref<1x128xf32, #tpu.memory_space<vmem>>, vector<1x128xf32>
    %10 = vector.shape_cast %9 : vector<1x128xf32> to vector<1x1x128xf32>
    %11 = vector.broadcast %10 : vector<1x1x128xf32> to vector<8x8x128xf32>
    %12 = arith.addf %8, %11 : vector<8x8x128xf32>
    %c0_7 = arith.constant 0 : index
    %c0_8 = arith.constant 0 : index
    %c0_9 = arith.constant 0 : index
    %13 = vector.load %arg10[%c0_7, %c0_8, %c0_9] : memref<8x8x128xf32, #tpu.memory_space<vmem>>, vector<8x8x128xf32>
    tpu.vector_store %arg10[%c0_7, %c0_8, %c0_9], %12 {strides = array<i32>} : memref<8x8x128xf32, #tpu.memory_space<vmem>>, vector<8x8x128xf32>,
    %c0_10 = arith.constant 0 : index
    %c0_11 = arith.constant 0 : index
    %14 = vector.load %arg5[%c0_10, %c0_11] : memref<128x128xbf16, #tpu.memory_space<vmem>>, vector<128x128xbf16>
    %c0_12 = arith.constant 0 : index
    %c0_13 = arith.constant 0 : index
    %15 = vector.load %arg9[%c0_12, %c0_13] : memref<8x128xf32, #tpu.memory_space<vmem>>, vector<8x128xf32>
    %c0_i32_14 = arith.constant 0 : i32
    %c0_15 = arith.constant 0 : index
    %16 = arith.index_cast %c0_i32_14 : i32 to index
    %c0_16 = arith.constant 0 : index
    %17 = vector.load %arg10[%c0_15, %16, %c0_16] : memref<8x8x128xf32, #tpu.memory_space<vmem>>, vector<8x1x128xf32>
    %18 = vector.shape_cast %17 : vector<8x1x128xf32> to vector<8x128xf32>
    %19 = arith.truncf %15 : vector<8x128xf32> to vector<8x128xbf16>
    %cst_17 = arith.constant dense<0.000000e+00> : vector<8x128xf32>
    %20 = tpu.matmul %19, %14, %cst_17 {dimension_numbers = #tpu.dot_dimension_numbers<[1], [0], [0], [1], [0, 0, 1, 1], [], []>} : vector<8x128xbf16>, vector<128x128xbf16>, vector<8x128xf32> -> vector<8x128xf32>
    %21 = arith.addf %18, %20 : vector<8x128xf32>
    %22 = math.tanh %21 : vector<8x128xf32>
    %c0_18 = arith.constant 0 : index
    %23 = arith.index_cast %c0_i32_14 : i32 to index
    %c0_19 = arith.constant 0 : index
    %24 = vector.load %arg7[%c0_18, %23, %c0_19] : memref<8x8x128xf32, #tpu.memory_space<vmem>>, vector<8x1x128xf32>
    %25 = vector.shape_cast %24 : vector<8x1x128xf32> to vector<8x128xf32>
    %26 = vector.shape_cast %22 : vector<8x128xf32> to vector<8x1x128xf32>
    tpu.vector_store %arg7[%c0_18, %23, %c0_19], %26 {strides = array<i32>} : memref<8x8x128xf32, #tpu.memory_space<vmem>>, vector<8x1x128xf32>,
    %c8_i32 = arith.constant 8 : i32
    %27 = arith.muli %arg1, %c8_i32 : i32
    %28 = arith.addi %27, %c0_i32_14 : i32
    %c7_i32 = arith.constant 7 : i32
    %29 = arith.cmpi eq, %28, %c7_i32 : i32
    %30 = arith.extui %29 : i1 to i32
    %c0_i32_20 = arith.constant 0 : i32
    %31 = arith.cmpi ne, %30, %c0_i32_20 : i32
    scf.if %31 {
      %c0_81 = arith.constant 0 : index
      %c0_82 = arith.constant 0 : index
      %145 = vector.load %arg8[%c0_81, %c0_82] : memref<8x128xf32, #tpu.memory_space<vmem>>, vector<8x128xf32>
      tpu.vector_store %arg8[%c0_81, %c0_82], %22 {strides = array<i32>} : memref<8x128xf32, #tpu.memory_space<vmem>>, vector<8x128xf32>,
    } else {
    }
    %c1_i32 = arith.constant 1 : i32
    %c0_21 = arith.constant 0 : index
    %32 = arith.index_cast %c1_i32 : i32 to index
    %c0_22 = arith.constant 0 : index
    %33 = vector.load %arg10[%c0_21, %32, %c0_22] : memref<8x8x128xf32, #tpu.memory_space<vmem>>, vector<8x1x128xf32>
    %34 = vector.shape_cast %33 : vector<8x1x128xf32> to vector<8x128xf32>
    %35 = arith.truncf %22 : vector<8x128xf32> to vector<8x128xbf16>
    %cst_23 = arith.constant dense<0.000000e+00> : vector<8x128xf32>
    %36 = tpu.matmul %35, %14, %cst_23 {dimension_numbers = #tpu.dot_dimension_numbers<[1], [0], [0], [1], [0, 0, 1, 1], [], []>} : vector<8x128xbf16>, vector<128x128xbf16>, vector<8x128xf32> -> vector<8x128xf32>
    %37 = arith.addf %34, %36 : vector<8x128xf32>
    %38 = math.tanh %37 : vector<8x128xf32>
    %c0_24 = arith.constant 0 : index
    %39 = arith.index_cast %c1_i32 : i32 to index
    %c0_25 = arith.constant 0 : index
    %40 = vector.load %arg7[%c0_24, %39, %c0_25] : memref<8x8x128xf32, #tpu.memory_space<vmem>>, vector<8x1x128xf32>
    %41 = vector.shape_cast %40 : vector<8x1x128xf32> to vector<8x128xf32>
    %42 = vector.shape_cast %38 : vector<8x128xf32> to vector<8x1x128xf32>
    tpu.vector_store %arg7[%c0_24, %39, %c0_25], %42 {strides = array<i32>} : memref<8x8x128xf32, #tpu.memory_space<vmem>>, vector<8x1x128xf32>,
    %c8_i32_26 = arith.constant 8 : i32
    %43 = arith.muli %arg1, %c8_i32_26 : i32
    %44 = arith.addi %43, %c1_i32 : i32
    %c7_i32_27 = arith.constant 7 : i32
    %45 = arith.cmpi eq, %44, %c7_i32_27 : i32
    %46 = arith.extui %45 : i1 to i32
    %c0_i32_28 = arith.constant 0 : i32
    %47 = arith.cmpi ne, %46, %c0_i32_28 : i32
    scf.if %47 {
      %c0_81 = arith.constant 0 : index
      %c0_82 = arith.constant 0 : index
      %145 = vector.load %arg8[%c0_81, %c0_82] : memref<8x128xf32, #tpu.memory_space<vmem>>, vector<8x128xf32>
      tpu.vector_store %arg8[%c0_81, %c0_82], %38 {strides = array<i32>} : memref<8x128xf32, #tpu.memory_space<vmem>>, vector<8x128xf32>,
    } else {
    }
    %c2_i32 = arith.constant 2 : i32
    %c0_29 = arith.constant 0 : index
    %48 = arith.index_cast %c2_i32 : i32 to index
    %c0_30 = arith.constant 0 : index
    %49 = vector.load %arg10[%c0_29, %48, %c0_30] : memref<8x8x128xf32, #tpu.memory_space<vmem>>, vector<8x1x128xf32>
    %50 = vector.shape_cast %49 : vector<8x1x128xf32> to vector<8x128xf32>
    %51 = arith.truncf %38 : vector<8x128xf32> to vector<8x128xbf16>
    %cst_31 = arith.constant dense<0.000000e+00> : vector<8x128xf32>
    %52 = tpu.matmul %51, %14, %cst_31 {dimension_numbers = #tpu.dot_dimension_numbers<[1], [0], [0], [1], [0, 0, 1, 1], [], []>} : vector<8x128xbf16>, vector<128x128xbf16>, vector<8x128xf32> -> vector<8x128xf32>
    %53 = arith.addf %50, %52 : vector<8x128xf32>
    %54 = math.tanh %53 : vector<8x128xf32>
    %c0_32 = arith.constant 0 : index
    %55 = arith.index_cast %c2_i32 : i32 to index
    %c0_33 = arith.constant 0 : index
    %56 = vector.load %arg7[%c0_32, %55, %c0_33] : memref<8x8x128xf32, #tpu.memory_space<vmem>>, vector<8x1x128xf32>
    %57 = vector.shape_cast %56 : vector<8x1x128xf32> to vector<8x128xf32>
    %58 = vector.shape_cast %54 : vector<8x128xf32> to vector<8x1x128xf32>
    tpu.vector_store %arg7[%c0_32, %55, %c0_33], %58 {strides = array<i32>} : memref<8x8x128xf32, #tpu.memory_space<vmem>>, vector<8x1x128xf32>,
    %c8_i32_34 = arith.constant 8 : i32
    %59 = arith.muli %arg1, %c8_i32_34 : i32
    %60 = arith.addi %59, %c2_i32 : i32
    %c7_i32_35 = arith.constant 7 : i32
    %61 = arith.cmpi eq, %60, %c7_i32_35 : i32
    %62 = arith.extui %61 : i1 to i32
    %c0_i32_36 = arith.constant 0 : i32
    %63 = arith.cmpi ne, %62, %c0_i32_36 : i32
    scf.if %63 {
      %c0_81 = arith.constant 0 : index
      %c0_82 = arith.constant 0 : index
      %145 = vector.load %arg8[%c0_81, %c0_82] : memref<8x128xf32, #tpu.memory_space<vmem>>, vector<8x128xf32>
      tpu.vector_store %arg8[%c0_81, %c0_82], %54 {strides = array<i32>} : memref<8x128xf32, #tpu.memory_space<vmem>>, vector<8x128xf32>,
    } else {
    }
    %c3_i32 = arith.constant 3 : i32
    %c0_37 = arith.constant 0 : index
    %64 = arith.index_cast %c3_i32 : i32 to index
    %c0_38 = arith.constant 0 : index
    %65 = vector.load %arg10[%c0_37, %64, %c0_38] : memref<8x8x128xf32, #tpu.memory_space<vmem>>, vector<8x1x128xf32>
    %66 = vector.shape_cast %65 : vector<8x1x128xf32> to vector<8x128xf32>
    %67 = arith.truncf %54 : vector<8x128xf32> to vector<8x128xbf16>
    %cst_39 = arith.constant dense<0.000000e+00> : vector<8x128xf32>
    %68 = tpu.matmul %67, %14, %cst_39 {dimension_numbers = #tpu.dot_dimension_numbers<[1], [0], [0], [1], [0, 0, 1, 1], [], []>} : vector<8x128xbf16>, vector<128x128xbf16>, vector<8x128xf32> -> vector<8x128xf32>
    %69 = arith.addf %66, %68 : vector<8x128xf32>
    %70 = math.tanh %69 : vector<8x128xf32>
    %c0_40 = arith.constant 0 : index
    %71 = arith.index_cast %c3_i32 : i32 to index
    %c0_41 = arith.constant 0 : index
    %72 = vector.load %arg7[%c0_40, %71, %c0_41] : memref<8x8x128xf32, #tpu.memory_space<vmem>>, vector<8x1x128xf32>
    %73 = vector.shape_cast %72 : vector<8x1x128xf32> to vector<8x128xf32>
    %74 = vector.shape_cast %70 : vector<8x128xf32> to vector<8x1x128xf32>
    tpu.vector_store %arg7[%c0_40, %71, %c0_41], %74 {strides = array<i32>} : memref<8x8x128xf32, #tpu.memory_space<vmem>>, vector<8x1x128xf32>,
    %c8_i32_42 = arith.constant 8 : i32
    %75 = arith.muli %arg1, %c8_i32_42 : i32
    %76 = arith.addi %75, %c3_i32 : i32
    %c7_i32_43 = arith.constant 7 : i32
    %77 = arith.cmpi eq, %76, %c7_i32_43 : i32
    %78 = arith.extui %77 : i1 to i32
    %c0_i32_44 = arith.constant 0 : i32
    %79 = arith.cmpi ne, %78, %c0_i32_44 : i32
    scf.if %79 {
      %c0_81 = arith.constant 0 : index
      %c0_82 = arith.constant 0 : index
      %145 = vector.load %arg8[%c0_81, %c0_82] : memref<8x128xf32, #tpu.memory_space<vmem>>, vector<8x128xf32>
      tpu.vector_store %arg8[%c0_81, %c0_82], %70 {strides = array<i32>} : memref<8x128xf32, #tpu.memory_space<vmem>>, vector<8x128xf32>,
    } else {
    }
    %c4_i32 = arith.constant 4 : i32
    %c0_45 = arith.constant 0 : index
    %80 = arith.index_cast %c4_i32 : i32 to index
    %c0_46 = arith.constant 0 : index
    %81 = vector.load %arg10[%c0_45, %80, %c0_46] : memref<8x8x128xf32, #tpu.memory_space<vmem>>, vector<8x1x128xf32>
    %82 = vector.shape_cast %81 : vector<8x1x128xf32> to vector<8x128xf32>
    %83 = arith.truncf %70 : vector<8x128xf32> to vector<8x128xbf16>
    %cst_47 = arith.constant dense<0.000000e+00> : vector<8x128xf32>
    %84 = tpu.matmul %83, %14, %cst_47 {dimension_numbers = #tpu.dot_dimension_numbers<[1], [0], [0], [1], [0, 0, 1, 1], [], []>} : vector<8x128xbf16>, vector<128x128xbf16>, vector<8x128xf32> -> vector<8x128xf32>
    %85 = arith.addf %82, %84 : vector<8x128xf32>
    %86 = math.tanh %85 : vector<8x128xf32>
    %c0_48 = arith.constant 0 : index
    %87 = arith.index_cast %c4_i32 : i32 to index
    %c0_49 = arith.constant 0 : index
    %88 = vector.load %arg7[%c0_48, %87, %c0_49] : memref<8x8x128xf32, #tpu.memory_space<vmem>>, vector<8x1x128xf32>
    %89 = vector.shape_cast %88 : vector<8x1x128xf32> to vector<8x128xf32>
    %90 = vector.shape_cast %86 : vector<8x128xf32> to vector<8x1x128xf32>
    tpu.vector_store %arg7[%c0_48, %87, %c0_49], %90 {strides = array<i32>} : memref<8x8x128xf32, #tpu.memory_space<vmem>>, vector<8x1x128xf32>,
    %c8_i32_50 = arith.constant 8 : i32
    %91 = arith.muli %arg1, %c8_i32_50 : i32
    %92 = arith.addi %91, %c4_i32 : i32
    %c7_i32_51 = arith.constant 7 : i32
    %93 = arith.cmpi eq, %92, %c7_i32_51 : i32
    %94 = arith.extui %93 : i1 to i32
    %c0_i32_52 = arith.constant 0 : i32
    %95 = arith.cmpi ne, %94, %c0_i32_52 : i32
    scf.if %95 {
      %c0_81 = arith.constant 0 : index
      %c0_82 = arith.constant 0 : index
      %145 = vector.load %arg8[%c0_81, %c0_82] : memref<8x128xf32, #tpu.memory_space<vmem>>, vector<8x128xf32>
      tpu.vector_store %arg8[%c0_81, %c0_82], %86 {strides = array<i32>} : memref<8x128xf32, #tpu.memory_space<vmem>>, vector<8x128xf32>,
    } else {
    }
    %c5_i32 = arith.constant 5 : i32
    %c0_53 = arith.constant 0 : index
    %96 = arith.index_cast %c5_i32 : i32 to index
    %c0_54 = arith.constant 0 : index
    %97 = vector.load %arg10[%c0_53, %96, %c0_54] : memref<8x8x128xf32, #tpu.memory_space<vmem>>, vector<8x1x128xf32>
    %98 = vector.shape_cast %97 : vector<8x1x128xf32> to vector<8x128xf32>
    %99 = arith.truncf %86 : vector<8x128xf32> to vector<8x128xbf16>
    %cst_55 = arith.constant dense<0.000000e+00> : vector<8x128xf32>
    %100 = tpu.matmul %99, %14, %cst_55 {dimension_numbers = #tpu.dot_dimension_numbers<[1], [0], [0], [1], [0, 0, 1, 1], [], []>} : vector<8x128xbf16>, vector<128x128xbf16>, vector<8x128xf32> -> vector<8x128xf32>
    %101 = arith.addf %98, %100 : vector<8x128xf32>
    %102 = math.tanh %101 : vector<8x128xf32>
    %c0_56 = arith.constant 0 : index
    %103 = arith.index_cast %c5_i32 : i32 to index
    %c0_57 = arith.constant 0 : index
    %104 = vector.load %arg7[%c0_56, %103, %c0_57] : memref<8x8x128xf32, #tpu.memory_space<vmem>>, vector<8x1x128xf32>
    %105 = vector.shape_cast %104 : vector<8x1x128xf32> to vector<8x128xf32>
    %106 = vector.shape_cast %102 : vector<8x128xf32> to vector<8x1x128xf32>
    tpu.vector_store %arg7[%c0_56, %103, %c0_57], %106 {strides = array<i32>} : memref<8x8x128xf32, #tpu.memory_space<vmem>>, vector<8x1x128xf32>,
    %c8_i32_58 = arith.constant 8 : i32
    %107 = arith.muli %arg1, %c8_i32_58 : i32
    %108 = arith.addi %107, %c5_i32 : i32
    %c7_i32_59 = arith.constant 7 : i32
    %109 = arith.cmpi eq, %108, %c7_i32_59 : i32
    %110 = arith.extui %109 : i1 to i32
    %c0_i32_60 = arith.constant 0 : i32
    %111 = arith.cmpi ne, %110, %c0_i32_60 : i32
    scf.if %111 {
      %c0_81 = arith.constant 0 : index
      %c0_82 = arith.constant 0 : index
      %145 = vector.load %arg8[%c0_81, %c0_82] : memref<8x128xf32, #tpu.memory_space<vmem>>, vector<8x128xf32>
      tpu.vector_store %arg8[%c0_81, %c0_82], %102 {strides = array<i32>} : memref<8x128xf32, #tpu.memory_space<vmem>>, vector<8x128xf32>,
    } else {
    }
    %c6_i32 = arith.constant 6 : i32
    %c0_61 = arith.constant 0 : index
    %112 = arith.index_cast %c6_i32 : i32 to index
    %c0_62 = arith.constant 0 : index
    %113 = vector.load %arg10[%c0_61, %112, %c0_62] : memref<8x8x128xf32, #tpu.memory_space<vmem>>, vector<8x1x128xf32>
    %114 = vector.shape_cast %113 : vector<8x1x128xf32> to vector<8x128xf32>
    %115 = arith.truncf %102 : vector<8x128xf32> to vector<8x128xbf16>
    %cst_63 = arith.constant dense<0.000000e+00> : vector<8x128xf32>
    %116 = tpu.matmul %115, %14, %cst_63 {dimension_numbers = #tpu.dot_dimension_numbers<[1], [0], [0], [1], [0, 0, 1, 1], [], []>} : vector<8x128xbf16>, vector<128x128xbf16>, vector<8x128xf32> -> vector<8x128xf32>
    %117 = arith.addf %114, %116 : vector<8x128xf32>
    %118 = math.tanh %117 : vector<8x128xf32>
    %c0_64 = arith.constant 0 : index
    %119 = arith.index_cast %c6_i32 : i32 to index
    %c0_65 = arith.constant 0 : index
    %120 = vector.load %arg7[%c0_64, %119, %c0_65] : memref<8x8x128xf32, #tpu.memory_space<vmem>>, vector<8x1x128xf32>
    %121 = vector.shape_cast %120 : vector<8x1x128xf32> to vector<8x128xf32>
    %122 = vector.shape_cast %118 : vector<8x128xf32> to vector<8x1x128xf32>
    tpu.vector_store %arg7[%c0_64, %119, %c0_65], %122 {strides = array<i32>} : memref<8x8x128xf32, #tpu.memory_space<vmem>>, vector<8x1x128xf32>,
    %c8_i32_66 = arith.constant 8 : i32
    %123 = arith.muli %arg1, %c8_i32_66 : i32
    %124 = arith.addi %123, %c6_i32 : i32
    %c7_i32_67 = arith.constant 7 : i32
    %125 = arith.cmpi eq, %124, %c7_i32_67 : i32
    %126 = arith.extui %125 : i1 to i32
    %c0_i32_68 = arith.constant 0 : i32
    %127 = arith.cmpi ne, %126, %c0_i32_68 : i32
    scf.if %127 {
      %c0_81 = arith.constant 0 : index
      %c0_82 = arith.constant 0 : index
      %145 = vector.load %arg8[%c0_81, %c0_82] : memref<8x128xf32, #tpu.memory_space<vmem>>, vector<8x128xf32>
      tpu.vector_store %arg8[%c0_81, %c0_82], %118 {strides = array<i32>} : memref<8x128xf32, #tpu.memory_space<vmem>>, vector<8x128xf32>,
    } else {
    }
    %c7_i32_69 = arith.constant 7 : i32
    %c0_70 = arith.constant 0 : index
    %128 = arith.index_cast %c7_i32_69 : i32 to index
    %c0_71 = arith.constant 0 : index
    %129 = vector.load %arg10[%c0_70, %128, %c0_71] : memref<8x8x128xf32, #tpu.memory_space<vmem>>, vector<8x1x128xf32>
    %130 = vector.shape_cast %129 : vector<8x1x128xf32> to vector<8x128xf32>
    %131 = arith.truncf %118 : vector<8x128xf32> to vector<8x128xbf16>
    %cst_72 = arith.constant dense<0.000000e+00> : vector<8x128xf32>
    %132 = tpu.matmul %131, %14, %cst_72 {dimension_numbers = #tpu.dot_dimension_numbers<[1], [0], [0], [1], [0, 0, 1, 1], [], []>} : vector<8x128xbf16>, vector<128x128xbf16>, vector<8x128xf32> -> vector<8x128xf32>
    %133 = arith.addf %130, %132 : vector<8x128xf32>
    %134 = math.tanh %133 : vector<8x128xf32>
    %c0_73 = arith.constant 0 : index
    %135 = arith.index_cast %c7_i32_69 : i32 to index
    %c0_74 = arith.constant 0 : index
    %136 = vector.load %arg7[%c0_73, %135, %c0_74] : memref<8x8x128xf32, #tpu.memory_space<vmem>>, vector<8x1x128xf32>
    %137 = vector.shape_cast %136 : vector<8x1x128xf32> to vector<8x128xf32>
    %138 = vector.shape_cast %134 : vector<8x128xf32> to vector<8x1x128xf32>
    tpu.vector_store %arg7[%c0_73, %135, %c0_74], %138 {strides = array<i32>} : memref<8x8x128xf32, #tpu.memory_space<vmem>>, vector<8x1x128xf32>,
    %c8_i32_75 = arith.constant 8 : i32
    %139 = arith.muli %arg1, %c8_i32_75 : i32
    %140 = arith.addi %139, %c7_i32_69 : i32
    %c7_i32_76 = arith.constant 7 : i32
    %141 = arith.cmpi eq, %140, %c7_i32_76 : i32
    %142 = arith.extui %141 : i1 to i32
    %c0_i32_77 = arith.constant 0 : i32
    %143 = arith.cmpi ne, %142, %c0_i32_77 : i32
    scf.if %143 {
      %c0_81 = arith.constant 0 : index
      %c0_82 = arith.constant 0 : index
      %145 = vector.load %arg8[%c0_81, %c0_82] : memref<8x128xf32, #tpu.memory_space<vmem>>, vector<8x128xf32>
      tpu.vector_store %arg8[%c0_81, %c0_82], %134 {strides = array<i32>} : memref<8x128xf32, #tpu.memory_space<vmem>>, vector<8x128xf32>,
    } else {
    }
    %c8_i32_78 = arith.constant 8 : i32
    %c0_79 = arith.constant 0 : index
    %c0_80 = arith.constant 0 : index
    %144 = vector.load %arg9[%c0_79, %c0_80] : memref<8x128xf32, #tpu.memory_space<vmem>>, vector<8x128xf32>
    tpu.vector_store %arg9[%c0_79, %c0_80], %134 {strides = array<i32>} : memref<8x128xf32, #tpu.memory_space<vmem>>, vector<8x128xf32>,
    return
  }
  func.func @transform_0(%arg0: i32, %arg1: i32) -> (i32, i32, i32) {
    %c0_i32 = arith.constant 0 : i32
    %c0_i32_0 = arith.constant 0 : i32
    return %arg0, %arg1, %c0_i32 : i32, i32, i32
  }
  func.func @transform_1(%arg0: i32, %arg1: i32) -> (i32, i32) {
    %c0_i32 = arith.constant 0 : i32
    %c0_i32_0 = arith.constant 0 : i32
    return %arg0, %c0_i32 : i32, i32
  }
  func.func @transform_2(%arg0: i32, %arg1: i32) -> (i32, i32) {
    %c0_i32 = arith.constant 0 : i32
    %c0_i32_0 = arith.constant 0 : i32
    %c0_i32_1 = arith.constant 0 : i32
    return %c0_i32, %c0_i32_0 : i32, i32
  }
  func.func @transform_3(%arg0: i32, %arg1: i32) -> (i32, i32) {
    %c0_i32 = arith.constant 0 : i32
    %c0_i32_0 = arith.constant 0 : i32
    %c0_i32_1 = arith.constant 0 : i32
    return %c0_i32, %c0_i32_0 : i32, i32
  }
  func.func @transform_4(%arg0: i32, %arg1: i32) -> (i32, i32) {
    %c0_i32 = arith.constant 0 : i32
    %c0_i32_0 = arith.constant 0 : i32
    %c0_i32_1 = arith.constant 0 : i32
    return %c0_i32, %c0_i32_0 : i32, i32
  }
  func.func @transform_5(%arg0: i32, %arg1: i32) -> (i32, i32, i32) {
    %c0_i32 = arith.constant 0 : i32
    %c0_i32_0 = arith.constant 0 : i32
    return %arg0, %arg1, %c0_i32 : i32, i32, i32
  }
  func.func @transform_6(%arg0: i32, %arg1: i32) -> (i32, i32) {
    %c0_i32 = arith.constant 0 : i32
    %c0_i32_0 = arith.constant 0 : i32
    return %arg0, %c0_i32 : i32, i32
  }
}

</mosaic_0001>

<llo_original>
// kernel: _lambda_.1
$region0: #{_lambda_.1}
  #allocation0 [shape = 'u32[]', space=smem, size = 0x4, offset = 0x4, fixed_abs, tag = 'smem constant byte address 0x4 - core index']
  #allocation1 [shape = 'u32[144,128]{1,0:T(1,128)}', space=vmem, size = 0x12000, scoped, tag = 'internal scratch']
  #allocation2 [shape = 'f32[8,128]{1,0:T(8,128)}', space=vmem, size = 0x1000, scoped, tag = 'scratch operand']
  #allocation3 [shape = 'f32[8,8,128]{2,1,0:T(8,128)}', space=vmem, size = 0x8000, scoped, tag = 'scratch operand']
  %s0 = inlined_call_operand.vmem [shape: f32[8,8,128], index: 0, kind: input, shape index: {}]
  %s1 = inlined_call_operand.vmem [shape: f32[8,128], index: 1, kind: input, shape index: {}]
  %s2 = inlined_call_operand.vmem [shape: bf16[128,128], index: 2, kind: input, shape index: {}]
  %s3 = inlined_call_operand.vmem [shape: bf16[128,128], index: 3, kind: input, shape index: {}]
  %s4 = inlined_call_operand.vmem [shape: f32[1,128], index: 4, kind: input, shape index: {}]
  %s5 = inlined_call_operand.vmem [shape: f32[8,8,128], index: 5, kind: output, shape index: {0}]
  %s6 = inlined_call_operand.vmem [shape: f32[8,128], index: 6, kind: output, shape index: {1}]
  %7 = xla_tuple %s5, %s6
  %s8 = sld [smem:[#allocation0]]
  $region74: #{_lambda_.1} parent=0
    _
  %s10 = ssub.s32 1, %s8
  %s11 = scalar_select 0, %s10, %s8
  // Predicated region
  $region2: #{_lambda_.1} parent=0 // pred_check
    _
  $region3: #{_lambda_.1} parent=0 // pred_check_branch
    %13 = sbr.rel (0) target = $region5
  $region4: #{_lambda_.1} parent=0 // pred_region
    _
  $region5: #{_lambda_.1} parent=0 // pred_fallthru
    _
  // Predicated region
  $region6: #{_lambda_.1} parent=0 // pred_check
    _
  $region7: #{_lambda_.1} parent=0 // pred_check_branch
    %15 = sbr.rel (0) target = $region9
  $region8: #{_lambda_.1} parent=0 // pred_region
    _
  $region9: #{_lambda_.1} parent=0 // pred_fallthru
    _
  // Predicated region
  $region10: #{_lambda_.1} parent=0 // pred_check
    _
  $region11: #{_lambda_.1} parent=0 // pred_check_branch
    %17 = sbr.rel (0) target = $region13
  $region12: #{_lambda_.1} parent=0 // pred_region
    _
  $region13: #{_lambda_.1} parent=0 // pred_fallthru
    _
  // Predicated region
  $region14: #{_lambda_.1} parent=0 // pred_check
    _
  $region15: #{_lambda_.1} parent=0 // pred_check_branch
    %19 = sbr.rel (0) target = $region17
  $region16: #{_lambda_.1} parent=0 // pred_region
    _
  $region17: #{_lambda_.1} parent=0 // pred_fallthru
    _
  // Predicated region
  $region18: #{_lambda_.1} parent=0 // pred_check
    _
  $region19: #{_lambda_.1} parent=0 // pred_check_branch
    %21 = sbr.rel (0) target = $region21
  $region20: #{_lambda_.1} parent=0 // pred_region
    _
  $region21: #{_lambda_.1} parent=0 // pred_fallthru
    _
  %p23 = scmp.eq.s32.totalorder 0, 0
  // Predicated region
  $region22: #{_lambda_.1} parent=0 // pred_check
    %p24 = pneg %p23
  $region23: #{_lambda_.1} parent=0 // pred_check_branch
    %26 = sbr.rel (%p24) target = $region25
  $region24: #{_lambda_.1} parent=0 // pred_region
    %v27 = vld [vmem:[%s1] sm:$0xff]
    %28 = vst [vmem:[#allocation2] sm:$0xff] %v27
  $region25: #{_lambda_.1} parent=0 // pred_fallthru
    _
  %v29 = vld [vmem:[%s0] sm:$0xff]
  %v30 = vld [vmem:[%s0 + $0x8] sm:$0xff]
  %v31 = vld [vmem:[%s0 + $0x10] sm:$0xff]
  %v32 = vld [vmem:[%s0 + $0x18] sm:$0xff]
  %v33 = vld [vmem:[%s0 + $0x20] sm:$0xff]
  %v34 = vld [vmem:[%s0 + $0x28] sm:$0xff]
  %v35 = vld [vmem:[%s0 + $0x30] sm:$0xff]
  %v36 = vld [vmem:[%s0 + $0x38] sm:$0xff]
  %v37 = vpack.c.bf16 %v30, %v29
  %v38 = vpack.c.bf16 %v32, %v31
  %v39 = vpack.c.bf16 %v34, %v33
  %v40 = vpack.c.bf16 %v36, %v35
  %v41 = vld [vmem:[%s2] sm:$0xf]
  %v42 = vld [vmem:[%s2 + $0x4] sm:$0xf]
  %v43 = vld [vmem:[%s2 + $0x8] sm:$0xf]
  %v44 = vld [vmem:[%s2 + $0xc] sm:$0xf]
  %v45 = vld [vmem:[%s2 + $0x10] sm:$0xf]
  %v46 = vld [vmem:[%s2 + $0x14] sm:$0xf]
  %v47 = vld [vmem:[%s2 + $0x18] sm:$0xf]
  %v48 = vld [vmem:[%s2 + $0x1c] sm:$0xf]
  %v49 = vld [vmem:[%s2 + $0x20] sm:$0xf]
  %v50 = vld [vmem:[%s2 + $0x24] sm:$0xf]
  %v51 = vld [vmem:[%s2 + $0x28] sm:$0xf]
  %v52 = vld [vmem:[%s2 + $0x2c] sm:$0xf]
  %v53 = vld [vmem:[%s2 + $0x30] sm:$0xf]
  %v54 = vld [vmem:[%s2 + $0x34] sm:$0xf]
  %v55 = vld [vmem:[%s2 + $0x38] sm:$0xf]
  %v56 = vld [vmem:[%s2 + $0x3c] sm:$0xf]
  %v73 = vunpack.c.l.b16 %v41
  %v74 = vunpack.c.l.b16 %v42
  %v75 = vunpack.c.l.b16 %v43
  %v76 = vunpack.c.l.b16 %v44
  %v77 = vunpack.c.l.b16 %v45
  %v78 = vunpack.c.l.b16 %v46
  %v79 = vunpack.c.l.b16 %v47
  %v80 = vunpack.c.l.b16 %v48
  %v81 = vunpack.c.l.b16 %v49
  %v82 = vunpack.c.l.b16 %v50
  %v83 = vunpack.c.l.b16 %v51
  %v84 = vunpack.c.l.b16 %v52
  %v85 = vunpack.c.l.b16 %v53
  %v86 = vunpack.c.l.b16 %v54
  %v87 = vunpack.c.l.b16 %v55
  %v88 = vunpack.c.l.b16 %v56
  %v89 = vpack.c.b16 %v74, %v73
  %v90 = vpack.c.b16 %v76, %v75
  %v91 = vpack.c.b16 %v78, %v77
  %v92 = vpack.c.b16 %v80, %v79
  %v93 = vpack.c.b16 %v82, %v81
  %v94 = vpack.c.b16 %v84, %v83
  %v95 = vpack.c.b16 %v86, %v85
  %v96 = vpack.c.b16 %v88, %v87
  %105 = vmatprep.subr.bf16.mxu0 0
  %106 = vmatpush1.bf16.msra.mxu0 %v89
  %107 = vmatprep.subr.bf16.mxu0 0
  %108 = vmatpush1.bf16.msra.mxu0 %v90
  %109 = vmatprep.subr.bf16.mxu0 0
  %110 = vmatpush1.bf16.msra.mxu0 %v91
  %111 = vmatprep.subr.bf16.mxu0 0
  %112 = vmatpush1.bf16.msra.mxu0 %v92
  %113 = vmatprep.subr.bf16.mxu0 0
  %114 = vmatpush1.bf16.msra.mxu0 %v93
  %115 = vmatprep.subr.bf16.mxu0 0
  %116 = vmatpush1.bf16.msra.mxu0 %v94
  %117 = vmatprep.subr.bf16.mxu0 0
  %118 = vmatpush1.bf16.msra.mxu0 %v95
  %119 = vmatprep.subr.bf16.mxu0 0
  %120 = vmatpush1.bf16.msra.mxu0 %v96
  %121 = vmatprep.subr.bf16.mxu0 0
  %122 = vmatpush1.bf16.msra.mxu0 0
  %123 = vmatprep.subr.bf16.mxu0 0
  %124 = vmatpush1.bf16.msra.mxu0 0
  %125 = vmatprep.subr.bf16.mxu0 0
  %126 = vmatpush1.bf16.msra.mxu0 0
  %127 = vmatprep.subr.bf16.mxu0 0
  %128 = vmatpush1.bf16.msra.mxu0 0
  %129 = vmatprep.subr.bf16.mxu0 0
  %130 = vmatpush1.bf16.msra.mxu0 0
  %131 = vmatprep.subr.bf16.mxu0 0
  %132 = vmatpush1.bf16.msra.mxu0 0
  %133 = vmatprep.subr.bf16.mxu0 0
  %134 = vmatpush1.bf16.msra.mxu0 0
  %135 = vmatprep.subr.bf16.mxu0 0
  %136 = vmatpush1.bf16.msra.mxu0 0
  %137 = vmatprep.mubr.bf16.mxu0 0
  %138 = vmatmul.mubr.bf16.gmra.mrb[0].mxu0 %v37
  %v139 = vpop.f32.mrb[0].mxu0
  %v140 = vadd.f32 0.0, %v139
  %v141 = vpop.f32.mrb[0].mxu0
  %v142 = vpop.f32.mrb[0].mxu0
  %v143 = vadd.f32 0.0, %v142
  %v144 = vpop.f32.mrb[0].mxu0
  %145 = vmatprep.mubr.bf16.mxu0 0
  %146 = vmatmul.mubr.bf16.gmra.mrb[0].mxu0 %v38
  %v147 = vpop.f32.mrb[0].mxu0
  %v148 = vadd.f32 0.0, %v147
  %v149 = vpop.f32.mrb[0].mxu0
  %v150 = vpop.f32.mrb[0].mxu0
  %v151 = vadd.f32 0.0, %v150
  %v152 = vpop.f32.mrb[0].mxu0
  %153 = vmatprep.mubr.bf16.mxu0 0
  %154 = vmatmul.mubr.bf16.gmra.mrb[0].mxu0 %v39
  %v155 = vpop.f32.mrb[0].mxu0
  %v156 = vadd.f32 0.0, %v155
  %v157 = vpop.f32.mrb[0].mxu0
  %v158 = vpop.f32.mrb[0].mxu0
  %v159 = vadd.f32 0.0, %v158
  %v160 = vpop.f32.mrb[0].mxu0
  %161 = vmatprep.mubr.bf16.mxu0 0
  %162 = vmatmul.mubr.bf16.gmra.mrb[0].mxu0 %v40
  %v163 = vpop.f32.mrb[0].mxu0
  %v164 = vadd.f32 0.0, %v163
  %v165 = vpop.f32.mrb[0].mxu0
  %v166 = vpop.f32.mrb[0].mxu0
  %v167 = vadd.f32 0.0, %v166
  %v168 = vpop.f32.mrb[0].mxu0
  %169 = vdwg.mxu0
  %v170 = vld [vmem:[%s4] sm:$0x1]
  %v172 = vlaneseq
  %v173 = vshrl.u32 %v172, 7
  %v174 = vsub.s32 0, %v173
  %v175 = vrot.slane %v170, %v174
  %v177 = vadd.f32 %v140, %v175
  %v178 = vadd.f32 %v143, %v175
  %v179 = vadd.f32 %v148, %v175
  %v180 = vadd.f32 %v151, %v175
  %v181 = vadd.f32 %v156, %v175
  %v182 = vadd.f32 %v159, %v175
  %v183 = vadd.f32 %v164, %v175
  %v184 = vadd.f32 %v167, %v175
  %185 = vst [vmem:[#allocation3] sm:$0xff] %v177
  %186 = vst [vmem:[#allocation3 + $0x8] sm:$0xff] %v178
  %187 = vst [vmem:[#allocation3 + $0x10] sm:$0xff] %v179
  %188 = vst [vmem:[#allocation3 + $0x18] sm:$0xff] %v180
  %189 = vst [vmem:[#allocation3 + $0x20] sm:$0xff] %v181
  %190 = vst [vmem:[#allocation3 + $0x28] sm:$0xff] %v182
  %191 = vst [vmem:[#allocation3 + $0x30] sm:$0xff] %v183
  %192 = vst [vmem:[#allocation3 + $0x38] sm:$0xff] %v184
  %v193 = vld [vmem:[%s3] sm:$0xf]
  %v194 = vld [vmem:[%s3 + $0x4] sm:$0xf]
  %v195 = vld [vmem:[%s3 + $0x8] sm:$0xf]
  %v196 = vld [vmem:[%s3 + $0xc] sm:$0xf]
  %v197 = vld [vmem:[%s3 + $0x10] sm:$0xf]
  %v198 = vld [vmem:[%s3 + $0x14] sm:$0xf]
  %v199 = vld [vmem:[%s3 + $0x18] sm:$0xf]
  %v200 = vld [vmem:[%s3 + $0x1c] sm:$0xf]
  %v201 = vld [vmem:[%s3 + $0x20] sm:$0xf]
  %v202 = vld [vmem:[%s3 + $0x24] sm:$0xf]
  %v203 = vld [vmem:[%s3 + $0x28] sm:$0xf]
  %v204 = vld [vmem:[%s3 + $0x2c] sm:$0xf]
  %v205 = vld [vmem:[%s3 + $0x30] sm:$0xf]
  %v206 = vld [vmem:[%s3 + $0x34] sm:$0xf]
  %v207 = vld [vmem:[%s3 + $0x38] sm:$0xf]
  %v208 = vld [vmem:[%s3 + $0x3c] sm:$0xf]
  %v209 = vld [vmem:[#allocation2] sm:$0xff]
  %v210 = vld [vmem:[#allocation3] sm:$0x1]
  %v211 = vld [vmem:[#allocation3 + $0x8] sm:$0x1]
  %v212 = vld [vmem:[#allocation3 + $0x10] sm:$0x1]
  %v213 = vld [vmem:[#allocation3 + $0x18] sm:$0x1]
  %v214 = vld [vmem:[#allocation3 + $0x20] sm:$0x1]
  %v215 = vld [vmem:[#allocation3 + $0x28] sm:$0x1]
  %v216 = vld [vmem:[#allocation3 + $0x30] sm:$0x1]
  %v217 = vld [vmem:[#allocation3 + $0x38] sm:$0x1]
  %v218 = vpack.c.bf16 %v209, %v209
  %v235 = vunpack.c.l.b16 %v193
  %v236 = vunpack.c.l.b16 %v194
  %v237 = vunpack.c.l.b16 %v195
  %v238 = vunpack.c.l.b16 %v196
  %v239 = vunpack.c.l.b16 %v197
  %v240 = vunpack.c.l.b16 %v198
  %v241 = vunpack.c.l.b16 %v199
  %v242 = vunpack.c.l.b16 %v200
  %v243 = vunpack.c.l.b16 %v201
  %v244 = vunpack.c.l.b16 %v202
  %v245 = vunpack.c.l.b16 %v203
  %v246 = vunpack.c.l.b16 %v204
  %v247 = vunpack.c.l.b16 %v205
  %v248 = vunpack.c.l.b16 %v206
  %v249 = vunpack.c.l.b16 %v207
  %v250 = vunpack.c.l.b16 %v208
  %v251 = vpack.c.b16 %v236, %v235
  %v252 = vpack.c.b16 %v238, %v237
  %v253 = vpack.c.b16 %v240, %v239
  %v254 = vpack.c.b16 %v242, %v241
  %v255 = vpack.c.b16 %v244, %v243
  %v256 = vpack.c.b16 %v246, %v245
  %v257 = vpack.c.b16 %v248, %v247
  %v258 = vpack.c.b16 %v250, %v249
  %267 = vmatprep.subr.bf16.mxu0 0
  %268 = vmatpush1.bf16.msra.mxu0 %v251
  %269 = vmatprep.subr.bf16.mxu0 0
  %270 = vmatpush1.bf16.msra.mxu0 %v252
  %271 = vmatprep.subr.bf16.mxu0 0
  %272 = vmatpush1.bf16.msra.mxu0 %v253
  %273 = vmatprep.subr.bf16.mxu0 0
  %274 = vmatpush1.bf16.msra.mxu0 %v254
  %275 = vmatprep.subr.bf16.mxu0 0
  %276 = vmatpush1.bf16.msra.mxu0 %v255
  %277 = vmatprep.subr.bf16.mxu0 0
  %278 = vmatpush1.bf16.msra.mxu0 %v256
  %279 = vmatprep.subr.bf16.mxu0 0
  %280 = vmatpush1.bf16.msra.mxu0 %v257
  %281 = vmatprep.subr.bf16.mxu0 0
  %282 = vmatpush1.bf16.msra.mxu0 %v258
  %283 = vmatprep.subr.bf16.mxu0 0
  %284 = vmatpush1.bf16.msra.mxu0 0
  %285 = vmatprep.subr.bf16.mxu0 0
  %286 = vmatpush1.bf16.msra.mxu0 0
  %287 = vmatprep.subr.bf16.mxu0 0
  %288 = vmatpush1.bf16.msra.mxu0 0
  %289 = vmatprep.subr.bf16.mxu0 0
  %290 = vmatpush1.bf16.msra.mxu0 0
  %291 = vmatprep.subr.bf16.mxu0 0
  %292 = vmatpush1.bf16.msra.mxu0 0
  %293 = vmatprep.subr.bf16.mxu0 0
  %294 = vmatpush1.bf16.msra.mxu0 0
  %295 = vmatprep.subr.bf16.mxu0 0
  %296 = vmatpush1.bf16.msra.mxu0 0
  %297 = vmatprep.subr.bf16.mxu0 0
  %298 = vmatpush1.bf16.msra.mxu0 0
  %299 = vmatprep.mubr.bf16.mxu0 0
  %300 = vmatmul.mubr.bf16.gmra.mrb[0].mxu0 %v218
  %v301 = vpop.f32.mrb[0].mxu0
  %v302 = vadd.f32 0.0, %v301
  %v303 = vpop.f32.mrb[0].mxu0
  %v304 = vpop.f32.mrb[0].mxu0
  %v305 = vpop.f32.mrb[0].mxu0
  %306 = vdwg.mxu0
  %v308 = vrot.slane %v302, 1
  %v309 = vrot.slane %v302, 2
  %v310 = vrot.slane %v302, 3
  %v311 = vrot.slane %v302, 4
  %v312 = vrot.slane %v302, 5
  %v313 = vrot.slane %v302, 6
  %v314 = vrot.slane %v302, 7
  %v323 = vadd.f32 %v210, %v302
  %v324 = vadd.f32 %v211, %v308
  %v325 = vadd.f32 %v212, %v309
  %v326 = vadd.f32 %v213, %v310
  %v327 = vadd.f32 %v214, %v311
  %v328 = vadd.f32 %v215, %v312
  %v329 = vadd.f32 %v216, %v313
  %v330 = vadd.f32 %v217, %v314
  %v331 = vtanh.pop %v323
  %v332 = vtanh.pop %v324
  %v333 = vtanh.pop %v325
  %v334 = vtanh.pop %v326
  %v335 = vtanh.pop %v327
  %v336 = vtanh.pop %v328
  %v337 = vtanh.pop %v329
  %v338 = vtanh.pop %v330
  %339 = vst [vmem:[%s5] sm:$0x1] %v331
  %340 = vst [vmem:[%s5 + $0x8] sm:$0x1] %v332
  %341 = vst [vmem:[%s5 + $0x10] sm:$0x1] %v333
  %342 = vst [vmem:[%s5 + $0x18] sm:$0x1] %v334
  %343 = vst [vmem:[%s5 + $0x20] sm:$0x1] %v335
  %344 = vst [vmem:[%s5 + $0x28] sm:$0x1] %v336
  %345 = vst [vmem:[%s5 + $0x30] sm:$0x1] %v337
  %346 = vst [vmem:[%s5 + $0x38] sm:$0x1] %v338
  %s347 = smul.u32 0, 8
  %p348 = scmp.eq.s32.totalorder %s347, 7
  // Predicated region
  $region26: #{_lambda_.1} parent=0 // pred_check
    %p349 = pneg %p348
  $region27: #{_lambda_.1} parent=0 // pred_check_branch
    %351 = sbr.rel (%p349) target = $region29
  $region28: #{_lambda_.1} parent=0 // pred_region
    %v360 = vrot.slane %v332, 7
    %vm361 = vcmask 1041409
    %v362 = vsel %vm361, %v360, %v331
    %v363 = vrot.slane %v333, 6
    %vm364 = vcmask 1042434
    %v365 = vsel %vm364, %v363, %v362
    %v366 = vrot.slane %v334, 5
    %vm367 = vcmask 1043459
    %v368 = vsel %vm367, %v366, %v365
    %v369 = vrot.slane %v335, 4
    %vm370 = vcmask 1044484
    %v371 = vsel %vm370, %v369, %v368
    %v372 = vrot.slane %v336, 3
    %vm373 = vcmask 1045509
    %v374 = vsel %vm373, %v372, %v371
    %v375 = vrot.slane %v337, 2
    %vm376 = vcmask 1046534
    %v377 = vsel %vm376, %v375, %v374
    %v378 = vrot.slane %v338, 1
    %vm379 = vcmask 1047559
    %v380 = vsel %vm379, %v378, %v377
    %382 = vst [vmem:[%s6] sm:$0xff] %v380
  $region29: #{_lambda_.1} parent=0 // pred_fallthru
    _
  %v383 = vld [vmem:[#allocation3 + $0x1] sm:$0x1]
  %v384 = vld [vmem:[#allocation3 + $0x9] sm:$0x1]
  %v385 = vld [vmem:[#allocation3 + $0x11] sm:$0x1]
  %v386 = vld [vmem:[#allocation3 + $0x19] sm:$0x1]
  %v387 = vld [vmem:[#allocation3 + $0x21] sm:$0x1]
  %v388 = vld [vmem:[#allocation3 + $0x29] sm:$0x1]
  %v389 = vld [vmem:[#allocation3 + $0x31] sm:$0x1]
  %v390 = vld [vmem:[#allocation3 + $0x39] sm:$0x1]
  %v391 = vpack.c.bf16 %v331, %v331
  %v392 = vpack.c.bf16 %v332, %v332
  %v393 = vpack.c.bf16 %v333, %v333
  %v394 = vpack.c.bf16 %v334, %v334
  %v395 = vpack.c.bf16 %v335, %v335
  %v396 = vpack.c.bf16 %v336, %v336
  %v397 = vpack.c.bf16 %v337, %v337
  %v398 = vpack.c.bf16 %v338, %v338
  %v407 = vunpack.c.l.b16 %v391
  %v408 = vunpack.c.l.b16 %v392
  %v409 = vunpack.c.l.b16 %v393
  %v410 = vunpack.c.l.b16 %v394
  %v411 = vunpack.c.l.b16 %v395
  %v412 = vunpack.c.l.b16 %v396
  %v413 = vunpack.c.l.b16 %v397
  %v414 = vunpack.c.l.b16 %v398
  %v415 = vrot.slane %v408, 7
  %vm416 = vcmask 1041409
  %v417 = vsel %vm416, %v415, %v407
  %v418 = vrot.slane %v409, 6
  %vm419 = vcmask 1042434
  %v420 = vsel %vm419, %v418, %v417
  %v421 = vrot.slane %v410, 5
  %vm422 = vcmask 1043459
  %v423 = vsel %vm422, %v421, %v420
  %v424 = vrot.slane %v411, 4
  %vm425 = vcmask 1044484
  %v426 = vsel %vm425, %v424, %v423
  %v427 = vrot.slane %v412, 3
  %vm428 = vcmask 1045509
  %v429 = vsel %vm428, %v427, %v426
  %v430 = vrot.slane %v413, 2
  %vm431 = vcmask 1046534
  %v432 = vsel %vm431, %v430, %v429
  %v433 = vrot.slane %v414, 1
  %vm434 = vcmask 1047559
  %v435 = vsel %vm434, %v433, %v432
  %v436 = vpack.c.b16 %v435, %v435
  %438 = vmatprep.subr.bf16.mxu0 0
  %439 = vmatpush1.bf16.msra.mxu0 %v251
  %440 = vmatprep.subr.bf16.mxu0 0
  %441 = vmatpush1.bf16.msra.mxu0 %v252
  %442 = vmatprep.subr.bf16.mxu0 0
  %443 = vmatpush1.bf16.msra.mxu0 %v253
  %444 = vmatprep.subr.bf16.mxu0 0
  %445 = vmatpush1.bf16.msra.mxu0 %v254
  %446 = vmatprep.subr.bf16.mxu0 0
  %447 = vmatpush1.bf16.msra.mxu0 %v255
  %448 = vmatprep.subr.bf16.mxu0 0
  %449 = vmatpush1.bf16.msra.mxu0 %v256
  %450 = vmatprep.subr.bf16.mxu0 0
  %451 = vmatpush1.bf16.msra.mxu0 %v257
  %452 = vmatprep.subr.bf16.mxu0 0
  %453 = vmatpush1.bf16.msra.mxu0 %v258
  %454 = vmatprep.subr.bf16.mxu0 0
  %455 = vmatpush1.bf16.msra.mxu0 0
  %456 = vmatprep.subr.bf16.mxu0 0
  %457 = vmatpush1.bf16.msra.mxu0 0
  %458 = vmatprep.subr.bf16.mxu0 0
  %459 = vmatpush1.bf16.msra.mxu0 0
  %460 = vmatprep.subr.bf16.mxu0 0
  %461 = vmatpush1.bf16.msra.mxu0 0
  %462 = vmatprep.subr.bf16.mxu0 0
  %463 = vmatpush1.bf16.msra.mxu0 0
  %464 = vmatprep.subr.bf16.mxu0 0
  %465 = vmatpush1.bf16.msra.mxu0 0
  %466 = vmatprep.subr.bf16.mxu0 0
  %467 = vmatpush1.bf16.msra.mxu0 0
  %468 = vmatprep.subr.bf16.mxu0 0
  %469 = vmatpush1.bf16.msra.mxu0 0
  %470 = vmatprep.mubr.bf16.mxu0 0
  %471 = vmatmul.mubr.bf16.gmra.mrb[0].mxu0 %v436
  %v472 = vpop.f32.mrb[0].mxu0
  %v473 = vadd.f32 0.0, %v472
  %v474 = vpop.f32.mrb[0].mxu0
  %v475 = vpop.f32.mrb[0].mxu0
  %v476 = vpop.f32.mrb[0].mxu0
  %477 = vdwg.mxu0
  %v479 = vrot.slane %v473, 1
  %v480 = vrot.slane %v473, 2
  %v481 = vrot.slane %v473, 3
  %v482 = vrot.slane %v473, 4
  %v483 = vrot.slane %v473, 5
  %v484 = vrot.slane %v473, 6
  %v485 = vrot.slane %v473, 7
  %v494 = vadd.f32 %v383, %v473
  %v495 = vadd.f32 %v384, %v479
  %v496 = vadd.f32 %v385, %v480
  %v497 = vadd.f32 %v386, %v481
  %v498 = vadd.f32 %v387, %v482
  %v499 = vadd.f32 %v388, %v483
  %v500 = vadd.f32 %v389, %v484
  %v501 = vadd.f32 %v390, %v485
  %v502 = vtanh.pop %v494
  %v503 = vtanh.pop %v495
  %v504 = vtanh.pop %v496
  %v505 = vtanh.pop %v497
  %v506 = vtanh.pop %v498
  %v507 = vtanh.pop %v499
  %v508 = vtanh.pop %v500
  %v509 = vtanh.pop %v501
  %510 = vst [vmem:[%s5 + $0x1] sm:$0x1] %v502
  %511 = vst [vmem:[%s5 + $0x9] sm:$0x1] %v503
  %512 = vst [vmem:[%s5 + $0x11] sm:$0x1] %v504
  %513 = vst [vmem:[%s5 + $0x19] sm:$0x1] %v505
  %514 = vst [vmem:[%s5 + $0x21] sm:$0x1] %v506
  %515 = vst [vmem:[%s5 + $0x29] sm:$0x1] %v507
  %516 = vst [vmem:[%s5 + $0x31] sm:$0x1] %v508
  %517 = vst [vmem:[%s5 + $0x39] sm:$0x1] %v509
  %s518 = sadd.s32 %s347, 1
  %p519 = scmp.eq.s32.totalorder %s518, 7
  // Predicated region
  $region30: #{_lambda_.1} parent=0 // pred_check
    %p520 = pneg %p519
  $region31: #{_lambda_.1} parent=0 // pred_check_branch
    %522 = sbr.rel (%p520) target = $region33
  $region32: #{_lambda_.1} parent=0 // pred_region
    %v531 = vrot.slane %v503, 7
    %v532 = vsel %vm416, %v531, %v502
    %v533 = vrot.slane %v504, 6
    %v534 = vsel %vm419, %v533, %v532
    %v535 = vrot.slane %v505, 5
    %v536 = vsel %vm422, %v535, %v534
    %v537 = vrot.slane %v506, 4
    %v538 = vsel %vm425, %v537, %v536
    %v539 = vrot.slane %v507, 3
    %v540 = vsel %vm428, %v539, %v538
    %v541 = vrot.slane %v508, 2
    %v542 = vsel %vm431, %v541, %v540
    %v543 = vrot.slane %v509, 1
    %v544 = vsel %vm434, %v543, %v542
    %546 = vst [vmem:[%s6] sm:$0xff] %v544
  $region33: #{_lambda_.1} parent=0 // pred_fallthru
    _
  %v547 = vld [vmem:[#allocation3 + $0x2] sm:$0x1]
  %v548 = vld [vmem:[#allocation3 + $0xa] sm:$0x1]
  %v549 = vld [vmem:[#allocation3 + $0x12] sm:$0x1]
  %v550 = vld [vmem:[#allocation3 + $0x1a] sm:$0x1]
  %v551 = vld [vmem:[#allocation3 + $0x22] sm:$0x1]
  %v552 = vld [vmem:[#allocation3 + $0x2a] sm:$0x1]
  %v553 = vld [vmem:[#allocation3 + $0x32] sm:$0x1]
  %v554 = vld [vmem:[#allocation3 + $0x3a] sm:$0x1]
  %v555 = vpack.c.bf16 %v502, %v502
  %v556 = vpack.c.bf16 %v503, %v503
  %v557 = vpack.c.bf16 %v504, %v504
  %v558 = vpack.c.bf16 %v505, %v505
  %v559 = vpack.c.bf16 %v506, %v506
  %v560 = vpack.c.bf16 %v507, %v507
  %v561 = vpack.c.bf16 %v508, %v508
  %v562 = vpack.c.bf16 %v509, %v509
  %v571 = vunpack.c.l.b16 %v555
  %v572 = vunpack.c.l.b16 %v556
  %v573 = vunpack.c.l.b16 %v557
  %v574 = vunpack.c.l.b16 %v558
  %v575 = vunpack.c.l.b16 %v559
  %v576 = vunpack.c.l.b16 %v560
  %v577 = vunpack.c.l.b16 %v561
  %v578 = vunpack.c.l.b16 %v562
  %v579 = vrot.slane %v572, 7
  %v580 = vsel %vm416, %v579, %v571
  %v581 = vrot.slane %v573, 6
  %v582 = vsel %vm419, %v581, %v580
  %v583 = vrot.slane %v574, 5
  %v584 = vsel %vm422, %v583, %v582
  %v585 = vrot.slane %v575, 4
  %v586 = vsel %vm425, %v585, %v584
  %v587 = vrot.slane %v576, 3
  %v588 = vsel %vm428, %v587, %v586
  %v589 = vrot.slane %v577, 2
  %v590 = vsel %vm431, %v589, %v588
  %v591 = vrot.slane %v578, 1
  %v592 = vsel %vm434, %v591, %v590
  %v593 = vpack.c.b16 %v592, %v592
  %595 = vmatprep.subr.bf16.mxu0 0
  %596 = vmatpush1.bf16.msra.mxu0 %v251
  %597 = vmatprep.subr.bf16.mxu0 0
  %598 = vmatpush1.bf16.msra.mxu0 %v252
  %599 = vmatprep.subr.bf16.mxu0 0
  %600 = vmatpush1.bf16.msra.mxu0 %v253
  %601 = vmatprep.subr.bf16.mxu0 0
  %602 = vmatpush1.bf16.msra.mxu0 %v254
  %603 = vmatprep.subr.bf16.mxu0 0
  %604 = vmatpush1.bf16.msra.mxu0 %v255
  %605 = vmatprep.subr.bf16.mxu0 0
  %606 = vmatpush1.bf16.msra.mxu0 %v256
  %607 = vmatprep.subr.bf16.mxu0 0
  %608 = vmatpush1.bf16.msra.mxu0 %v257
  %609 = vmatprep.subr.bf16.mxu0 0
  %610 = vmatpush1.bf16.msra.mxu0 %v258
  %611 = vmatprep.subr.bf16.mxu0 0
  %612 = vmatpush1.bf16.msra.mxu0 0
  %613 = vmatprep.subr.bf16.mxu0 0
  %614 = vmatpush1.bf16.msra.mxu0 0
  %615 = vmatprep.subr.bf16.mxu0 0
  %616 = vmatpush1.bf16.msra.mxu0 0
  %617 = vmatprep.subr.bf16.mxu0 0
  %618 = vmatpush1.bf16.msra.mxu0 0
  %619 = vmatprep.subr.bf16.mxu0 0
  %620 = vmatpush1.bf16.msra.mxu0 0
  %621 = vmatprep.subr.bf16.mxu0 0
  %622 = vmatpush1.bf16.msra.mxu0 0
  %623 = vmatprep.subr.bf16.mxu0 0
  %624 = vmatpush1.bf16.msra.mxu0 0
  %625 = vmatprep.subr.bf16.mxu0 0
  %626 = vmatpush1.bf16.msra.mxu0 0
  %627 = vmatprep.mubr.bf16.mxu0 0
  %628 = vmatmul.mubr.bf16.gmra.mrb[0].mxu0 %v593
  %v629 = vpop.f32.mrb[0].mxu0
  %v630 = vadd.f32 0.0, %v629
  %v631 = vpop.f32.mrb[0].mxu0
  %v632 = vpop.f32.mrb[0].mxu0
  %v633 = vpop.f32.mrb[0].mxu0
  %634 = vdwg.mxu0
  %v636 = vrot.slane %v630, 1
  %v637 = vrot.slane %v630, 2
  %v638 = vrot.slane %v630, 3
  %v639 = vrot.slane %v630, 4
  %v640 = vrot.slane %v630, 5
  %v641 = vrot.slane %v630, 6
  %v642 = vrot.slane %v630, 7
  %v651 = vadd.f32 %v547, %v630
  %v652 = vadd.f32 %v548, %v636
  %v653 = vadd.f32 %v549, %v637
  %v654 = vadd.f32 %v550, %v638
  %v655 = vadd.f32 %v551, %v639
  %v656 = vadd.f32 %v552, %v640
  %v657 = vadd.f32 %v553, %v641
  %v658 = vadd.f32 %v554, %v642
  %v659 = vtanh.pop %v651
  %v660 = vtanh.pop %v652
  %v661 = vtanh.pop %v653
  %v662 = vtanh.pop %v654
  %v663 = vtanh.pop %v655
  %v664 = vtanh.pop %v656
  %v665 = vtanh.pop %v657
  %v666 = vtanh.pop %v658
  %667 = vst [vmem:[%s5 + $0x2] sm:$0x1] %v659
  %668 = vst [vmem:[%s5 + $0xa] sm:$0x1] %v660
  %669 = vst [vmem:[%s5 + $0x12] sm:$0x1] %v661
  %670 = vst [vmem:[%s5 + $0x1a] sm:$0x1] %v662
  %671 = vst [vmem:[%s5 + $0x22] sm:$0x1] %v663
  %672 = vst [vmem:[%s5 + $0x2a] sm:$0x1] %v664
  %673 = vst [vmem:[%s5 + $0x32] sm:$0x1] %v665
  %674 = vst [vmem:[%s5 + $0x3a] sm:$0x1] %v666
  %s675 = sadd.s32 %s347, 2
  %p676 = scmp.eq.s32.totalorder %s675, 7
  // Predicated region
  $region34: #{_lambda_.1} parent=0 // pred_check
    %p677 = pneg %p676
  $region35: #{_lambda_.1} parent=0 // pred_check_branch
    %679 = sbr.rel (%p677) target = $region37
  $region36: #{_lambda_.1} parent=0 // pred_region
    %v688 = vrot.slane %v660, 7
    %v689 = vsel %vm416, %v688, %v659
    %v690 = vrot.slane %v661, 6
    %v691 = vsel %vm419, %v690, %v689
    %v692 = vrot.slane %v662, 5
    %v693 = vsel %vm422, %v692, %v691
    %v694 = vrot.slane %v663, 4
    %v695 = vsel %vm425, %v694, %v693
    %v696 = vrot.slane %v664, 3
    %v697 = vsel %vm428, %v696, %v695
    %v698 = vrot.slane %v665, 2
    %v699 = vsel %vm431, %v698, %v697
    %v700 = vrot.slane %v666, 1
    %v701 = vsel %vm434, %v700, %v699
    %703 = vst [vmem:[%s6] sm:$0xff] %v701
  $region37: #{_lambda_.1} parent=0 // pred_fallthru
    _
  %v704 = vld [vmem:[#allocation3 + $0x3] sm:$0x1]
  %v705 = vld [vmem:[#allocation3 + $0xb] sm:$0x1]
  %v706 = vld [vmem:[#allocation3 + $0x13] sm:$0x1]
  %v707 = vld [vmem:[#allocation3 + $0x1b] sm:$0x1]
  %v708 = vld [vmem:[#allocation3 + $0x23] sm:$0x1]
  %v709 = vld [vmem:[#allocation3 + $0x2b] sm:$0x1]
  %v710 = vld [vmem:[#allocation3 + $0x33] sm:$0x1]
  %v711 = vld [vmem:[#allocation3 + $0x3b] sm:$0x1]
  %v712 = vpack.c.bf16 %v659, %v659
  %v713 = vpack.c.bf16 %v660, %v660
  %v714 = vpack.c.bf16 %v661, %v661
  %v715 = vpack.c.bf16 %v662, %v662
  %v716 = vpack.c.bf16 %v663, %v663
  %v717 = vpack.c.bf16 %v664, %v664
  %v718 = vpack.c.bf16 %v665, %v665
  %v719 = vpack.c.bf16 %v666, %v666
  %v728 = vunpack.c.l.b16 %v712
  %v729 = vunpack.c.l.b16 %v713
  %v730 = vunpack.c.l.b16 %v714
  %v731 = vunpack.c.l.b16 %v715
  %v732 = vunpack.c.l.b16 %v716
  %v733 = vunpack.c.l.b16 %v717
  %v734 = vunpack.c.l.b16 %v718
  %v735 = vunpack.c.l.b16 %v719
  %v736 = vrot.slane %v729, 7
  %v737 = vsel %vm416, %v736, %v728
  %v738 = vrot.slane %v730, 6
  %v739 = vsel %vm419, %v738, %v737
  %v740 = vrot.slane %v731, 5
  %v741 = vsel %vm422, %v740, %v739
  %v742 = vrot.slane %v732, 4
  %v743 = vsel %vm425, %v742, %v741
  %v744 = vrot.slane %v733, 3
  %v745 = vsel %vm428, %v744, %v743
  %v746 = vrot.slane %v734, 2
  %v747 = vsel %vm431, %v746, %v745
  %v748 = vrot.slane %v735, 1
  %v749 = vsel %vm434, %v748, %v747
  %v750 = vpack.c.b16 %v749, %v749
  %752 = vmatprep.subr.bf16.mxu0 0
  %753 = vmatpush1.bf16.msra.mxu0 %v251
  %754 = vmatprep.subr.bf16.mxu0 0
  %755 = vmatpush1.bf16.msra.mxu0 %v252
  %756 = vmatprep.subr.bf16.mxu0 0
  %757 = vmatpush1.bf16.msra.mxu0 %v253
  %758 = vmatprep.subr.bf16.mxu0 0
  %759 = vmatpush1.bf16.msra.mxu0 %v254
  %760 = vmatprep.subr.bf16.mxu0 0
  %761 = vmatpush1.bf16.msra.mxu0 %v255
  %762 = vmatprep.subr.bf16.mxu0 0
  %763 = vmatpush1.bf16.msra.mxu0 %v256
  %764 = vmatprep.subr.bf16.mxu0 0
  %765 = vmatpush1.bf16.msra.mxu0 %v257
  %766 = vmatprep.subr.bf16.mxu0 0
  %767 = vmatpush1.bf16.msra.mxu0 %v258
  %768 = vmatprep.subr.bf16.mxu0 0
  %769 = vmatpush1.bf16.msra.mxu0 0
  %770 = vmatprep.subr.bf16.mxu0 0
  %771 = vmatpush1.bf16.msra.mxu0 0
  %772 = vmatprep.subr.bf16.mxu0 0
  %773 = vmatpush1.bf16.msra.mxu0 0
  %774 = vmatprep.subr.bf16.mxu0 0
  %775 = vmatpush1.bf16.msra.mxu0 0
  %776 = vmatprep.subr.bf16.mxu0 0
  %777 = vmatpush1.bf16.msra.mxu0 0
  %778 = vmatprep.subr.bf16.mxu0 0
  %779 = vmatpush1.bf16.msra.mxu0 0
  %780 = vmatprep.subr.bf16.mxu0 0
  %781 = vmatpush1.bf16.msra.mxu0 0
  %782 = vmatprep.subr.bf16.mxu0 0
  %783 = vmatpush1.bf16.msra.mxu0 0
  %784 = vmatprep.mubr.bf16.mxu0 0
  %785 = vmatmul.mubr.bf16.gmra.mrb[0].mxu0 %v750
  %v786 = vpop.f32.mrb[0].mxu0
  %v787 = vadd.f32 0.0, %v786
  %v788 = vpop.f32.mrb[0].mxu0
  %v789 = vpop.f32.mrb[0].mxu0
  %v790 = vpop.f32.mrb[0].mxu0
  %791 = vdwg.mxu0
  %v793 = vrot.slane %v787, 1
  %v794 = vrot.slane %v787, 2
  %v795 = vrot.slane %v787, 3
  %v796 = vrot.slane %v787, 4
  %v797 = vrot.slane %v787, 5
  %v798 = vrot.slane %v787, 6
  %v799 = vrot.slane %v787, 7
  %v808 = vadd.f32 %v704, %v787
  %v809 = vadd.f32 %v705, %v793
  %v810 = vadd.f32 %v706, %v794
  %v811 = vadd.f32 %v707, %v795
  %v812 = vadd.f32 %v708, %v796
  %v813 = vadd.f32 %v709, %v797
  %v814 = vadd.f32 %v710, %v798
  %v815 = vadd.f32 %v711, %v799
  %v816 = vtanh.pop %v808
  %v817 = vtanh.pop %v809
  %v818 = vtanh.pop %v810
  %v819 = vtanh.pop %v811
  %v820 = vtanh.pop %v812
  %v821 = vtanh.pop %v813
  %v822 = vtanh.pop %v814
  %v823 = vtanh.pop %v815
  %824 = vst [vmem:[%s5 + $0x3] sm:$0x1] %v816
  %825 = vst [vmem:[%s5 + $0xb] sm:$0x1] %v817
  %826 = vst [vmem:[%s5 + $0x13] sm:$0x1] %v818
  %827 = vst [vmem:[%s5 + $0x1b] sm:$0x1] %v819
  %828 = vst [vmem:[%s5 + $0x23] sm:$0x1] %v820
  %829 = vst [vmem:[%s5 + $0x2b] sm:$0x1] %v821
  %830 = vst [vmem:[%s5 + $0x33] sm:$0x1] %v822
  %831 = vst [vmem:[%s5 + $0x3b] sm:$0x1] %v823
  %s832 = sadd.s32 %s347, 3
  %p833 = scmp.eq.s32.totalorder %s832, 7
  // Predicated region
  $region38: #{_lambda_.1} parent=0 // pred_check
    %p834 = pneg %p833
  $region39: #{_lambda_.1} parent=0 // pred_check_branch
    %836 = sbr.rel (%p834) target = $region41
  $region40: #{_lambda_.1} parent=0 // pred_region
    %v845 = vrot.slane %v817, 7
    %v846 = vsel %vm416, %v845, %v816
    %v847 = vrot.slane %v818, 6
    %v848 = vsel %vm419, %v847, %v846
    %v849 = vrot.slane %v819, 5
    %v850 = vsel %vm422, %v849, %v848
    %v851 = vrot.slane %v820, 4
    %v852 = vsel %vm425, %v851, %v850
    %v853 = vrot.slane %v821, 3
    %v854 = vsel %vm428, %v853, %v852
    %v855 = vrot.slane %v822, 2
    %v856 = vsel %vm431, %v855, %v854
    %v857 = vrot.slane %v823, 1
    %v858 = vsel %vm434, %v857, %v856
    %860 = vst [vmem:[%s6] sm:$0xff] %v858
  $region41: #{_lambda_.1} parent=0 // pred_fallthru
    _
  %v861 = vld [vmem:[#allocation3 + $0x4] sm:$0x1]
  %v862 = vld [vmem:[#allocation3 + $0xc] sm:$0x1]
  %v863 = vld [vmem:[#allocation3 + $0x14] sm:$0x1]
  %v864 = vld [vmem:[#allocation3 + $0x1c] sm:$0x1]
  %v865 = vld [vmem:[#allocation3 + $0x24] sm:$0x1]
  %v866 = vld [vmem:[#allocation3 + $0x2c] sm:$0x1]
  %v867 = vld [vmem:[#allocation3 + $0x34] sm:$0x1]
  %v868 = vld [vmem:[#allocation3 + $0x3c] sm:$0x1]
  %v869 = vpack.c.bf16 %v816, %v816
  %v870 = vpack.c.bf16 %v817, %v817
  %v871 = vpack.c.bf16 %v818, %v818
  %v872 = vpack.c.bf16 %v819, %v819
  %v873 = vpack.c.bf16 %v820, %v820
  %v874 = vpack.c.bf16 %v821, %v821
  %v875 = vpack.c.bf16 %v822, %v822
  %v876 = vpack.c.bf16 %v823, %v823
  %v885 = vunpack.c.l.b16 %v869
  %v886 = vunpack.c.l.b16 %v870
  %v887 = vunpack.c.l.b16 %v871
  %v888 = vunpack.c.l.b16 %v872
  %v889 = vunpack.c.l.b16 %v873
  %v890 = vunpack.c.l.b16 %v874
  %v891 = vunpack.c.l.b16 %v875
  %v892 = vunpack.c.l.b16 %v876
  %v893 = vrot.slane %v886, 7
  %v894 = vsel %vm416, %v893, %v885
  %v895 = vrot.slane %v887, 6
  %v896 = vsel %vm419, %v895, %v894
  %v897 = vrot.slane %v888, 5
  %v898 = vsel %vm422, %v897, %v896
  %v899 = vrot.slane %v889, 4
  %v900 = vsel %vm425, %v899, %v898
  %v901 = vrot.slane %v890, 3
  %v902 = vsel %vm428, %v901, %v900
  %v903 = vrot.slane %v891, 2
  %v904 = vsel %vm431, %v903, %v902
  %v905 = vrot.slane %v892, 1
  %v906 = vsel %vm434, %v905, %v904
  %v907 = vpack.c.b16 %v906, %v906
  %909 = vmatprep.subr.bf16.mxu0 0
  %910 = vmatpush1.bf16.msra.mxu0 %v251
  %911 = vmatprep.subr.bf16.mxu0 0
  %912 = vmatpush1.bf16.msra.mxu0 %v252
  %913 = vmatprep.subr.bf16.mxu0 0
  %914 = vmatpush1.bf16.msra.mxu0 %v253
  %915 = vmatprep.subr.bf16.mxu0 0
  %916 = vmatpush1.bf16.msra.mxu0 %v254
  %917 = vmatprep.subr.bf16.mxu0 0
  %918 = vmatpush1.bf16.msra.mxu0 %v255
  %919 = vmatprep.subr.bf16.mxu0 0
  %920 = vmatpush1.bf16.msra.mxu0 %v256
  %921 = vmatprep.subr.bf16.mxu0 0
  %922 = vmatpush1.bf16.msra.mxu0 %v257
  %923 = vmatprep.subr.bf16.mxu0 0
  %924 = vmatpush1.bf16.msra.mxu0 %v258
  %925 = vmatprep.subr.bf16.mxu0 0
  %926 = vmatpush1.bf16.msra.mxu0 0
  %927 = vmatprep.subr.bf16.mxu0 0
  %928 = vmatpush1.bf16.msra.mxu0 0
  %929 = vmatprep.subr.bf16.mxu0 0
  %930 = vmatpush1.bf16.msra.mxu0 0
  %931 = vmatprep.subr.bf16.mxu0 0
  %932 = vmatpush1.bf16.msra.mxu0 0
  %933 = vmatprep.subr.bf16.mxu0 0
  %934 = vmatpush1.bf16.msra.mxu0 0
  %935 = vmatprep.subr.bf16.mxu0 0
  %936 = vmatpush1.bf16.msra.mxu0 0
  %937 = vmatprep.subr.bf16.mxu0 0
  %938 = vmatpush1.bf16.msra.mxu0 0
  %939 = vmatprep.subr.bf16.mxu0 0
  %940 = vmatpush1.bf16.msra.mxu0 0
  %941 = vmatprep.mubr.bf16.mxu0 0
  %942 = vmatmul.mubr.bf16.gmra.mrb[0].mxu0 %v907
  %v943 = vpop.f32.mrb[0].mxu0
  %v944 = vadd.f32 0.0, %v943
  %v945 = vpop.f32.mrb[0].mxu0
  %v946 = vpop.f32.mrb[0].mxu0
  %v947 = vpop.f32.mrb[0].mxu0
  %948 = vdwg.mxu0
  %v950 = vrot.slane %v944, 1
  %v951 = vrot.slane %v944, 2
  %v952 = vrot.slane %v944, 3
  %v953 = vrot.slane %v944, 4
  %v954 = vrot.slane %v944, 5
  %v955 = vrot.slane %v944, 6
  %v956 = vrot.slane %v944, 7
  %v965 = vadd.f32 %v861, %v944
  %v966 = vadd.f32 %v862, %v950
  %v967 = vadd.f32 %v863, %v951
  %v968 = vadd.f32 %v864, %v952
  %v969 = vadd.f32 %v865, %v953
  %v970 = vadd.f32 %v866, %v954
  %v971 = vadd.f32 %v867, %v955
  %v972 = vadd.f32 %v868, %v956
  %v973 = vtanh.pop %v965
  %v974 = vtanh.pop %v966
  %v975 = vtanh.pop %v967
  %v976 = vtanh.pop %v968
  %v977 = vtanh.pop %v969
  %v978 = vtanh.pop %v970
  %v979 = vtanh.pop %v971
  %v980 = vtanh.pop %v972
  %981 = vst [vmem:[%s5 + $0x4] sm:$0x1] %v973
  %982 = vst [vmem:[%s5 + $0xc] sm:$0x1] %v974
  %983 = vst [vmem:[%s5 + $0x14] sm:$0x1] %v975
  %984 = vst [vmem:[%s5 + $0x1c] sm:$0x1] %v976
  %985 = vst [vmem:[%s5 + $0x24] sm:$0x1] %v977
  %986 = vst [vmem:[%s5 + $0x2c] sm:$0x1] %v978
  %987 = vst [vmem:[%s5 + $0x34] sm:$0x1] %v979
  %988 = vst [vmem:[%s5 + $0x3c] sm:$0x1] %v980
  %s989 = sadd.s32 %s347, 4
  %p990 = scmp.eq.s32.totalorder %s989, 7
  // Predicated region
  $region42: #{_lambda_.1} parent=0 // pred_check
    %p991 = pneg %p990
  $region43: #{_lambda_.1} parent=0 // pred_check_branch
    %993 = sbr.rel (%p991) target = $region45
  $region44: #{_lambda_.1} parent=0 // pred_region
    %v1002 = vrot.slane %v974, 7
    %v1003 = vsel %vm416, %v1002, %v973
    %v1004 = vrot.slane %v975, 6
    %v1005 = vsel %vm419, %v1004, %v1003
    %v1006 = vrot.slane %v976, 5
    %v1007 = vsel %vm422, %v1006, %v1005
    %v1008 = vrot.slane %v977, 4
    %v1009 = vsel %vm425, %v1008, %v1007
    %v1010 = vrot.slane %v978, 3
    %v1011 = vsel %vm428, %v1010, %v1009
    %v1012 = vrot.slane %v979, 2
    %v1013 = vsel %vm431, %v1012, %v1011
    %v1014 = vrot.slane %v980, 1
    %v1015 = vsel %vm434, %v1014, %v1013
    %1017 = vst [vmem:[%s6] sm:$0xff] %v1015
  $region45: #{_lambda_.1} parent=0 // pred_fallthru
    _
  %v1018 = vld [vmem:[#allocation3 + $0x5] sm:$0x1]
  %v1019 = vld [vmem:[#allocation3 + $0xd] sm:$0x1]
  %v1020 = vld [vmem:[#allocation3 + $0x15] sm:$0x1]
  %v1021 = vld [vmem:[#allocation3 + $0x1d] sm:$0x1]
  %v1022 = vld [vmem:[#allocation3 + $0x25] sm:$0x1]
  %v1023 = vld [vmem:[#allocation3 + $0x2d] sm:$0x1]
  %v1024 = vld [vmem:[#allocation3 + $0x35] sm:$0x1]
  %v1025 = vld [vmem:[#allocation3 + $0x3d] sm:$0x1]
  %v1026 = vpack.c.bf16 %v973, %v973
  %v1027 = vpack.c.bf16 %v974, %v974
  %v1028 = vpack.c.bf16 %v975, %v975
  %v1029 = vpack.c.bf16 %v976, %v976
  %v1030 = vpack.c.bf16 %v977, %v977
  %v1031 = vpack.c.bf16 %v978, %v978
  %v1032 = vpack.c.bf16 %v979, %v979
  %v1033 = vpack.c.bf16 %v980, %v980
  %v1042 = vunpack.c.l.b16 %v1026
  %v1043 = vunpack.c.l.b16 %v1027
  %v1044 = vunpack.c.l.b16 %v1028
  %v1045 = vunpack.c.l.b16 %v1029
  %v1046 = vunpack.c.l.b16 %v1030
  %v1047 = vunpack.c.l.b16 %v1031
  %v1048 = vunpack.c.l.b16 %v1032
  %v1049 = vunpack.c.l.b16 %v1033
  %v1050 = vrot.slane %v1043, 7
  %v1051 = vsel %vm416, %v1050, %v1042
  %v1052 = vrot.slane %v1044, 6
  %v1053 = vsel %vm419, %v1052, %v1051
  %v1054 = vrot.slane %v1045, 5
  %v1055 = vsel %vm422, %v1054, %v1053
  %v1056 = vrot.slane %v1046, 4
  %v1057 = vsel %vm425, %v1056, %v1055
  %v1058 = vrot.slane %v1047, 3
  %v1059 = vsel %vm428, %v1058, %v1057
  %v1060 = vrot.slane %v1048, 2
  %v1061 = vsel %vm431, %v1060, %v1059
  %v1062 = vrot.slane %v1049, 1
  %v1063 = vsel %vm434, %v1062, %v1061
  %v1064 = vpack.c.b16 %v1063, %v1063
  %1066 = vmatprep.subr.bf16.mxu0 0
  %1067 = vmatpush1.bf16.msra.mxu0 %v251
  %1068 = vmatprep.subr.bf16.mxu0 0
  %1069 = vmatpush1.bf16.msra.mxu0 %v252
  %1070 = vmatprep.subr.bf16.mxu0 0
  %1071 = vmatpush1.bf16.msra.mxu0 %v253
  %1072 = vmatprep.subr.bf16.mxu0 0
  %1073 = vmatpush1.bf16.msra.mxu0 %v254
  %1074 = vmatprep.subr.bf16.mxu0 0
  %1075 = vmatpush1.bf16.msra.mxu0 %v255
  %1076 = vmatprep.subr.bf16.mxu0 0
  %1077 = vmatpush1.bf16.msra.mxu0 %v256
  %1078 = vmatprep.subr.bf16.mxu0 0
  %1079 = vmatpush1.bf16.msra.mxu0 %v257
  %1080 = vmatprep.subr.bf16.mxu0 0
  %1081 = vmatpush1.bf16.msra.mxu0 %v258
  %1082 = vmatprep.subr.bf16.mxu0 0
  %1083 = vmatpush1.bf16.msra.mxu0 0
  %1084 = vmatprep.subr.bf16.mxu0 0
  %1085 = vmatpush1.bf16.msra.mxu0 0
  %1086 = vmatprep.subr.bf16.mxu0 0
  %1087 = vmatpush1.bf16.msra.mxu0 0
  %1088 = vmatprep.subr.bf16.mxu0 0
  %1089 = vmatpush1.bf16.msra.mxu0 0
  %1090 = vmatprep.subr.bf16.mxu0 0
  %1091 = vmatpush1.bf16.msra.mxu0 0
  %1092 = vmatprep.subr.bf16.mxu0 0
  %1093 = vmatpush1.bf16.msra.mxu0 0
  %1094 = vmatprep.subr.bf16.mxu0 0
  %1095 = vmatpush1.bf16.msra.mxu0 0
  %1096 = vmatprep.subr.bf16.mxu0 0
  %1097 = vmatpush1.bf16.msra.mxu0 0
  %1098 = vmatprep.mubr.bf16.mxu0 0
  %1099 = vmatmul.mubr.bf16.gmra.mrb[0].mxu0 %v1064
  %v1100 = vpop.f32.mrb[0].mxu0
  %v1101 = vadd.f32 0.0, %v1100
  %v1102 = vpop.f32.mrb[0].mxu0
  %v1103 = vpop.f32.mrb[0].mxu0
  %v1104 = vpop.f32.mrb[0].mxu0
  %1105 = vdwg.mxu0
  %v1107 = vrot.slane %v1101, 1
  %v1108 = vrot.slane %v1101, 2
  %v1109 = vrot.slane %v1101, 3
  %v1110 = vrot.slane %v1101, 4
  %v1111 = vrot.slane %v1101, 5
  %v1112 = vrot.slane %v1101, 6
  %v1113 = vrot.slane %v1101, 7
  %v1122 = vadd.f32 %v1018, %v1101
  %v1123 = vadd.f32 %v1019, %v1107
  %v1124 = vadd.f32 %v1020, %v1108
  %v1125 = vadd.f32 %v1021, %v1109
  %v1126 = vadd.f32 %v1022, %v1110
  %v1127 = vadd.f32 %v1023, %v1111
  %v1128 = vadd.f32 %v1024, %v1112
  %v1129 = vadd.f32 %v1025, %v1113
  %v1130 = vtanh.pop %v1122
  %v1131 = vtanh.pop %v1123
  %v1132 = vtanh.pop %v1124
  %v1133 = vtanh.pop %v1125
  %v1134 = vtanh.pop %v1126
  %v1135 = vtanh.pop %v1127
  %v1136 = vtanh.pop %v1128
  %v1137 = vtanh.pop %v1129
  %1138 = vst [vmem:[%s5 + $0x5] sm:$0x1] %v1130
  %1139 = vst [vmem:[%s5 + $0xd] sm:$0x1] %v1131
  %1140 = vst [vmem:[%s5 + $0x15] sm:$0x1] %v1132
  %1141 = vst [vmem:[%s5 + $0x1d] sm:$0x1] %v1133
  %1142 = vst [vmem:[%s5 + $0x25] sm:$0x1] %v1134
  %1143 = vst [vmem:[%s5 + $0x2d] sm:$0x1] %v1135
  %1144 = vst [vmem:[%s5 + $0x35] sm:$0x1] %v1136
  %1145 = vst [vmem:[%s5 + $0x3d] sm:$0x1] %v1137
  %s1146 = sadd.s32 %s347, 5
  %p1147 = scmp.eq.s32.totalorder %s1146, 7
  // Predicated region
  $region46: #{_lambda_.1} parent=0 // pred_check
    %p1148 = pneg %p1147
  $region47: #{_lambda_.1} parent=0 // pred_check_branch
    %1150 = sbr.rel (%p1148) target = $region49
  $region48: #{_lambda_.1} parent=0 // pred_region
    %v1159 = vrot.slane %v1131, 7
    %v1160 = vsel %vm416, %v1159, %v1130
    %v1161 = vrot.slane %v1132, 6
    %v1162 = vsel %vm419, %v1161, %v1160
    %v1163 = vrot.slane %v1133, 5
    %v1164 = vsel %vm422, %v1163, %v1162
    %v1165 = vrot.slane %v1134, 4
    %v1166 = vsel %vm425, %v1165, %v1164
    %v1167 = vrot.slane %v1135, 3
    %v1168 = vsel %vm428, %v1167, %v1166
    %v1169 = vrot.slane %v1136, 2
    %v1170 = vsel %vm431, %v1169, %v1168
    %v1171 = vrot.slane %v1137, 1
    %v1172 = vsel %vm434, %v1171, %v1170
    %1174 = vst [vmem:[%s6] sm:$0xff] %v1172
  $region49: #{_lambda_.1} parent=0 // pred_fallthru
    _
  %v1175 = vld [vmem:[#allocation3 + $0x6] sm:$0x1]
  %v1176 = vld [vmem:[#allocation3 + $0xe] sm:$0x1]
  %v1177 = vld [vmem:[#allocation3 + $0x16] sm:$0x1]
  %v1178 = vld [vmem:[#allocation3 + $0x1e] sm:$0x1]
  %v1179 = vld [vmem:[#allocation3 + $0x26] sm:$0x1]
  %v1180 = vld [vmem:[#allocation3 + $0x2e] sm:$0x1]
  %v1181 = vld [vmem:[#allocation3 + $0x36] sm:$0x1]
  %v1182 = vld [vmem:[#allocation3 + $0x3e] sm:$0x1]
  %v1183 = vpack.c.bf16 %v1130, %v1130
  %v1184 = vpack.c.bf16 %v1131, %v1131
  %v1185 = vpack.c.bf16 %v1132, %v1132
  %v1186 = vpack.c.bf16 %v1133, %v1133
  %v1187 = vpack.c.bf16 %v1134, %v1134
  %v1188 = vpack.c.bf16 %v1135, %v1135
  %v1189 = vpack.c.bf16 %v1136, %v1136
  %v1190 = vpack.c.bf16 %v1137, %v1137
  %v1199 = vunpack.c.l.b16 %v1183
  %v1200 = vunpack.c.l.b16 %v1184
  %v1201 = vunpack.c.l.b16 %v1185
  %v1202 = vunpack.c.l.b16 %v1186
  %v1203 = vunpack.c.l.b16 %v1187
  %v1204 = vunpack.c.l.b16 %v1188
  %v1205 = vunpack.c.l.b16 %v1189
  %v1206 = vunpack.c.l.b16 %v1190
  %v1207 = vrot.slane %v1200, 7
  %v1208 = vsel %vm416, %v1207, %v1199
  %v1209 = vrot.slane %v1201, 6
  %v1210 = vsel %vm419, %v1209, %v1208
  %v1211 = vrot.slane %v1202, 5
  %v1212 = vsel %vm422, %v1211, %v1210
  %v1213 = vrot.slane %v1203, 4
  %v1214 = vsel %vm425, %v1213, %v1212
  %v1215 = vrot.slane %v1204, 3
  %v1216 = vsel %vm428, %v1215, %v1214
  %v1217 = vrot.slane %v1205, 2
  %v1218 = vsel %vm431, %v1217, %v1216
  %v1219 = vrot.slane %v1206, 1
  %v1220 = vsel %vm434, %v1219, %v1218
  %v1221 = vpack.c.b16 %v1220, %v1220
  %1223 = vmatprep.subr.bf16.mxu0 0
  %1224 = vmatpush1.bf16.msra.mxu0 %v251
  %1225 = vmatprep.subr.bf16.mxu0 0
  %1226 = vmatpush1.bf16.msra.mxu0 %v252
  %1227 = vmatprep.subr.bf16.mxu0 0
  %1228 = vmatpush1.bf16.msra.mxu0 %v253
  %1229 = vmatprep.subr.bf16.mxu0 0
  %1230 = vmatpush1.bf16.msra.mxu0 %v254
  %1231 = vmatprep.subr.bf16.mxu0 0
  %1232 = vmatpush1.bf16.msra.mxu0 %v255
  %1233 = vmatprep.subr.bf16.mxu0 0
  %1234 = vmatpush1.bf16.msra.mxu0 %v256
  %1235 = vmatprep.subr.bf16.mxu0 0
  %1236 = vmatpush1.bf16.msra.mxu0 %v257
  %1237 = vmatprep.subr.bf16.mxu0 0
  %1238 = vmatpush1.bf16.msra.mxu0 %v258
  %1239 = vmatprep.subr.bf16.mxu0 0
  %1240 = vmatpush1.bf16.msra.mxu0 0
  %1241 = vmatprep.subr.bf16.mxu0 0
  %1242 = vmatpush1.bf16.msra.mxu0 0
  %1243 = vmatprep.subr.bf16.mxu0 0
  %1244 = vmatpush1.bf16.msra.mxu0 0
  %1245 = vmatprep.subr.bf16.mxu0 0
  %1246 = vmatpush1.bf16.msra.mxu0 0
  %1247 = vmatprep.subr.bf16.mxu0 0
  %1248 = vmatpush1.bf16.msra.mxu0 0
  %1249 = vmatprep.subr.bf16.mxu0 0
  %1250 = vmatpush1.bf16.msra.mxu0 0
  %1251 = vmatprep.subr.bf16.mxu0 0
  %1252 = vmatpush1.bf16.msra.mxu0 0
  %1253 = vmatprep.subr.bf16.mxu0 0
  %1254 = vmatpush1.bf16.msra.mxu0 0
  %1255 = vmatprep.mubr.bf16.mxu0 0
  %1256 = vmatmul.mubr.bf16.gmra.mrb[0].mxu0 %v1221
  %v1257 = vpop.f32.mrb[0].mxu0
  %v1258 = vadd.f32 0.0, %v1257
  %v1259 = vpop.f32.mrb[0].mxu0
  %v1260 = vpop.f32.mrb[0].mxu0
  %v1261 = vpop.f32.mrb[0].mxu0
  %1262 = vdwg.mxu0
  %v1264 = vrot.slane %v1258, 1
  %v1265 = vrot.slane %v1258, 2
  %v1266 = vrot.slane %v1258, 3
  %v1267 = vrot.slane %v1258, 4
  %v1268 = vrot.slane %v1258, 5
  %v1269 = vrot.slane %v1258, 6
  %v1270 = vrot.slane %v1258, 7
  %v1279 = vadd.f32 %v1175, %v1258
  %v1280 = vadd.f32 %v1176, %v1264
  %v1281 = vadd.f32 %v1177, %v1265
  %v1282 = vadd.f32 %v1178, %v1266
  %v1283 = vadd.f32 %v1179, %v1267
  %v1284 = vadd.f32 %v1180, %v1268
  %v1285 = vadd.f32 %v1181, %v1269
  %v1286 = vadd.f32 %v1182, %v1270
  %v1287 = vtanh.pop %v1279
  %v1288 = vtanh.pop %v1280
  %v1289 = vtanh.pop %v1281
  %v1290 = vtanh.pop %v1282
  %v1291 = vtanh.pop %v1283
  %v1292 = vtanh.pop %v1284
  %v1293 = vtanh.pop %v1285
  %v1294 = vtanh.pop %v1286
  %1295 = vst [vmem:[%s5 + $0x6] sm:$0x1] %v1287
  %1296 = vst [vmem:[%s5 + $0xe] sm:$0x1] %v1288
  %1297 = vst [vmem:[%s5 + $0x16] sm:$0x1] %v1289
  %1298 = vst [vmem:[%s5 + $0x1e] sm:$0x1] %v1290
  %1299 = vst [vmem:[%s5 + $0x26] sm:$0x1] %v1291
  %1300 = vst [vmem:[%s5 + $0x2e] sm:$0x1] %v1292
  %1301 = vst [vmem:[%s5 + $0x36] sm:$0x1] %v1293
  %1302 = vst [vmem:[%s5 + $0x3e] sm:$0x1] %v1294
  %s1303 = sadd.s32 %s347, 6
  %p1304 = scmp.eq.s32.totalorder %s1303, 7
  // Predicated region
  $region50: #{_lambda_.1} parent=0 // pred_check
    %p1305 = pneg %p1304
  $region51: #{_lambda_.1} parent=0 // pred_check_branch
    %1307 = sbr.rel (%p1305) target = $region53
  $region52: #{_lambda_.1} parent=0 // pred_region
    %v1316 = vrot.slane %v1288, 7
    %v1317 = vsel %vm416, %v1316, %v1287
    %v1318 = vrot.slane %v1289, 6
    %v1319 = vsel %vm419, %v1318, %v1317
    %v1320 = vrot.slane %v1290, 5
    %v1321 = vsel %vm422, %v1320, %v1319
    %v1322 = vrot.slane %v1291, 4
    %v1323 = vsel %vm425, %v1322, %v1321
    %v1324 = vrot.slane %v1292, 3
    %v1325 = vsel %vm428, %v1324, %v1323
    %v1326 = vrot.slane %v1293, 2
    %v1327 = vsel %vm431, %v1326, %v1325
    %v1328 = vrot.slane %v1294, 1
    %v1329 = vsel %vm434, %v1328, %v1327
    %1331 = vst [vmem:[%s6] sm:$0xff] %v1329
  $region53: #{_lambda_.1} parent=0 // pred_fallthru
    _
  %v1332 = vld [vmem:[#allocation3 + $0x7] sm:$0x1]
  %v1333 = vld [vmem:[#allocation3 + $0xf] sm:$0x1]
  %v1334 = vld [vmem:[#allocation3 + $0x17] sm:$0x1]
  %v1335 = vld [vmem:[#allocation3 + $0x1f] sm:$0x1]
  %v1336 = vld [vmem:[#allocation3 + $0x27] sm:$0x1]
  %v1337 = vld [vmem:[#allocation3 + $0x2f] sm:$0x1]
  %v1338 = vld [vmem:[#allocation3 + $0x37] sm:$0x1]
  %v1339 = vld [vmem:[#allocation3 + $0x3f] sm:$0x1]
  %v1340 = vpack.c.bf16 %v1287, %v1287
  %v1341 = vpack.c.bf16 %v1288, %v1288
  %v1342 = vpack.c.bf16 %v1289, %v1289
  %v1343 = vpack.c.bf16 %v1290, %v1290
  %v1344 = vpack.c.bf16 %v1291, %v1291
  %v1345 = vpack.c.bf16 %v1292, %v1292
  %v1346 = vpack.c.bf16 %v1293, %v1293
  %v1347 = vpack.c.bf16 %v1294, %v1294
  %v1356 = vunpack.c.l.b16 %v1340
  %v1357 = vunpack.c.l.b16 %v1341
  %v1358 = vunpack.c.l.b16 %v1342
  %v1359 = vunpack.c.l.b16 %v1343
  %v1360 = vunpack.c.l.b16 %v1344
  %v1361 = vunpack.c.l.b16 %v1345
  %v1362 = vunpack.c.l.b16 %v1346
  %v1363 = vunpack.c.l.b16 %v1347
  %v1364 = vrot.slane %v1357, 7
  %v1365 = vsel %vm416, %v1364, %v1356
  %v1366 = vrot.slane %v1358, 6
  %v1367 = vsel %vm419, %v1366, %v1365
  %v1368 = vrot.slane %v1359, 5
  %v1369 = vsel %vm422, %v1368, %v1367
  %v1370 = vrot.slane %v1360, 4
  %v1371 = vsel %vm425, %v1370, %v1369
  %v1372 = vrot.slane %v1361, 3
  %v1373 = vsel %vm428, %v1372, %v1371
  %v1374 = vrot.slane %v1362, 2
  %v1375 = vsel %vm431, %v1374, %v1373
  %v1376 = vrot.slane %v1363, 1
  %v1377 = vsel %vm434, %v1376, %v1375
  %v1378 = vpack.c.b16 %v1377, %v1377
  %1380 = vmatprep.subr.bf16.mxu0 0
  %1381 = vmatpush1.bf16.msra.mxu0 %v251
  %1382 = vmatprep.subr.bf16.mxu0 0
  %1383 = vmatpush1.bf16.msra.mxu0 %v252
  %1384 = vmatprep.subr.bf16.mxu0 0
  %1385 = vmatpush1.bf16.msra.mxu0 %v253
  %1386 = vmatprep.subr.bf16.mxu0 0
  %1387 = vmatpush1.bf16.msra.mxu0 %v254
  %1388 = vmatprep.subr.bf16.mxu0 0
  %1389 = vmatpush1.bf16.msra.mxu0 %v255
  %1390 = vmatprep.subr.bf16.mxu0 0
  %1391 = vmatpush1.bf16.msra.mxu0 %v256
  %1392 = vmatprep.subr.bf16.mxu0 0
  %1393 = vmatpush1.bf16.msra.mxu0 %v257
  %1394 = vmatprep.subr.bf16.mxu0 0
  %1395 = vmatpush1.bf16.msra.mxu0 %v258
  %1396 = vmatprep.subr.bf16.mxu0 0
  %1397 = vmatpush1.bf16.msra.mxu0 0
  %1398 = vmatprep.subr.bf16.mxu0 0
  %1399 = vmatpush1.bf16.msra.mxu0 0
  %1400 = vmatprep.subr.bf16.mxu0 0
  %1401 = vmatpush1.bf16.msra.mxu0 0
  %1402 = vmatprep.subr.bf16.mxu0 0
  %1403 = vmatpush1.bf16.msra.mxu0 0
  %1404 = vmatprep.subr.bf16.mxu0 0
  %1405 = vmatpush1.bf16.msra.mxu0 0
  %1406 = vmatprep.subr.bf16.mxu0 0
  %1407 = vmatpush1.bf16.msra.mxu0 0
  %1408 = vmatprep.subr.bf16.mxu0 0
  %1409 = vmatpush1.bf16.msra.mxu0 0
  %1410 = vmatprep.subr.bf16.mxu0 0
  %1411 = vmatpush1.bf16.msra.mxu0 0
  %1412 = vmatprep.mubr.bf16.mxu0 0
  %1413 = vmatmul.mubr.bf16.gmra.mrb[0].mxu0 %v1378
  %v1414 = vpop.f32.mrb[0].mxu0
  %v1415 = vadd.f32 0.0, %v1414
  %v1416 = vpop.f32.mrb[0].mxu0
  %v1417 = vpop.f32.mrb[0].mxu0
  %v1418 = vpop.f32.mrb[0].mxu0
  %1419 = vdwg.mxu0
  %v1421 = vrot.slane %v1415, 1
  %v1422 = vrot.slane %v1415, 2
  %v1423 = vrot.slane %v1415, 3
  %v1424 = vrot.slane %v1415, 4
  %v1425 = vrot.slane %v1415, 5
  %v1426 = vrot.slane %v1415, 6
  %v1427 = vrot.slane %v1415, 7
  %v1436 = vadd.f32 %v1332, %v1415
  %v1437 = vadd.f32 %v1333, %v1421
  %v1438 = vadd.f32 %v1334, %v1422
  %v1439 = vadd.f32 %v1335, %v1423
  %v1440 = vadd.f32 %v1336, %v1424
  %v1441 = vadd.f32 %v1337, %v1425
  %v1442 = vadd.f32 %v1338, %v1426
  %v1443 = vadd.f32 %v1339, %v1427
  %v1444 = vtanh.pop %v1436
  %v1445 = vtanh.pop %v1437
  %v1446 = vtanh.pop %v1438
  %v1447 = vtanh.pop %v1439
  %v1448 = vtanh.pop %v1440
  %v1449 = vtanh.pop %v1441
  %v1450 = vtanh.pop %v1442
  %v1451 = vtanh.pop %v1443
  %1452 = vst [vmem:[%s5 + $0x7] sm:$0x1] %v1444
  %1453 = vst [vmem:[%s5 + $0xf] sm:$0x1] %v1445
  %1454 = vst [vmem:[%s5 + $0x17] sm:$0x1] %v1446
  %1455 = vst [vmem:[%s5 + $0x1f] sm:$0x1] %v1447
  %1456 = vst [vmem:[%s5 + $0x27] sm:$0x1] %v1448
  %1457 = vst [vmem:[%s5 + $0x2f] sm:$0x1] %v1449
  %1458 = vst [vmem:[%s5 + $0x37] sm:$0x1] %v1450
  %1459 = vst [vmem:[%s5 + $0x3f] sm:$0x1] %v1451
  %s1460 = sadd.s32 %s347, 7
  %p1461 = scmp.eq.s32.totalorder %s1460, 7
  // Predicated region
  $region54: #{_lambda_.1} parent=0 // pred_check
    %p1462 = pneg %p1461
  $region55: #{_lambda_.1} parent=0 // pred_check_branch
    %1464 = sbr.rel (%p1462) target = $region57
  $region56: #{_lambda_.1} parent=0 // pred_region
    %v1473 = vrot.slane %v1445, 7
    %v1474 = vsel %vm416, %v1473, %v1444
    %v1475 = vrot.slane %v1446, 6
    %v1476 = vsel %vm419, %v1475, %v1474
    %v1477 = vrot.slane %v1447, 5
    %v1478 = vsel %vm422, %v1477, %v1476
    %v1479 = vrot.slane %v1448, 4
    %v1480 = vsel %vm425, %v1479, %v1478
    %v1481 = vrot.slane %v1449, 3
    %v1482 = vsel %vm428, %v1481, %v1480
    %v1483 = vrot.slane %v1450, 2
    %v1484 = vsel %vm431, %v1483, %v1482
    %v1485 = vrot.slane %v1451, 1
    %v1486 = vsel %vm434, %v1485, %v1484
    %1488 = vst [vmem:[%s6] sm:$0xff] %v1486
  $region57: #{_lambda_.1} parent=0 // pred_fallthru
    _
  %v1497 = vrot.slane %v1445, 7
  %v1498 = vsel %vm416, %v1497, %v1444
  %v1499 = vrot.slane %v1446, 6
  %v1500 = vsel %vm419, %v1499, %v1498
  %v1501 = vrot.slane %v1447, 5
  %v1502 = vsel %vm422, %v1501, %v1500
  %v1503 = vrot.slane %v1448, 4
  %v1504 = vsel %vm425, %v1503, %v1502
  %v1505 = vrot.slane %v1449, 3
  %v1506 = vsel %vm428, %v1505, %v1504
  %v1507 = vrot.slane %v1450, 2
  %v1508 = vsel %vm431, %v1507, %v1506
  %v1509 = vrot.slane %v1451, 1
  %v1510 = vsel %vm434, %v1509, %v1508
  %1512 = vst [vmem:[#allocation2] sm:$0xff] %v1510
  // Predicated region
  $region58: #{_lambda_.1} parent=0 // pred_check
    _
  $region59: #{_lambda_.1} parent=0 // pred_check_branch
    %1514 = sbr.rel (0) target = $region61
  $region60: #{_lambda_.1} parent=0 // pred_region
    _
  $region61: #{_lambda_.1} parent=0 // pred_fallthru
    _
  // Predicated region
  $region62: #{_lambda_.1} parent=0 // pred_check
    _
  $region63: #{_lambda_.1} parent=0 // pred_check_branch
    %1516 = sbr.rel (0) target = $region65
  $region64: #{_lambda_.1} parent=0 // pred_region
    _
  $region65: #{_lambda_.1} parent=0 // pred_fallthru
    _
  // Predicated region
  $region66: #{_lambda_.1} parent=0 // pred_check
    _
  $region67: #{_lambda_.1} parent=0 // pred_check_branch
    %1518 = sbr.rel (0) target = $region69
  $region68: #{_lambda_.1} parent=0 // pred_region
    _
  $region69: #{_lambda_.1} parent=0 // pred_fallthru
    _
  // Predicated region
  $region70: #{_lambda_.1} parent=0 // pred_check
    _
  $region71: #{_lambda_.1} parent=0 // pred_check_branch
    %1520 = sbr.rel (0) target = $region73
  $region72: #{_lambda_.1} parent=0 // pred_region
    _
  $region73: #{_lambda_.1} parent=0 // pred_fallthru
    _

</llo_original>
